<compile_context>
chip_gen: v7x
topology: tpu7x:2x2x1
jax: 0.10.0
libtpu: 0.0.40
codegen_flags: <defaults>
</compile_context>

<pallas_src>
import functools

import jax
import jax.numpy as jnp
import numpy as np
from jax.experimental import pallas as pl
from jax.experimental.pallas import tpu as pltpu


# --------------------------------------------------------------------------
# Fused kernel: one batch element per grid step.
#   feat_ref : (1, H, W, C)        f32
#   low_ref  : (1, H, W, Cl)       f32 (already nearest-resized to HxW)
#   w_ref    : (9*Cin, Cout)       bf16 (im2col tap-major weight layout)
#   scale_ref, shift_ref : (1, Cout) f32 (conv bias folded into shift)
#   out_ref  : (1, H, W, Cout)     f32
# --------------------------------------------------------------------------
def _cf_fused_kernel(feat_ref, low_ref, w_ref, scale_ref, shift_ref, out_ref):
    _, H, W, _ = out_ref.shape
    Cout = out_ref.shape[-1]

    feat = feat_ref[...]                                   # (1, H, W, C)
    low = low_ref[...]                                     # (1, H, W, Cl)

    # Channel-attention gate (f32; sigmoid goes to the EUP).
    gate = jax.nn.sigmoid(jnp.mean(low, axis=-1, keepdims=True))

    # Concat in registers; cast to bf16 for the MXU.
    cat = jnp.concatenate(
        [(gate * feat).astype(jnp.bfloat16), low.astype(jnp.bfloat16)],
        axis=-1)                                           # (1, H, W, Cin)
    Cin = cat.shape[-1]

    # SAME padding built in-register (no HBM round trip, no scratch slab).
    zrow = jnp.zeros((1, 1, W, Cin), jnp.bfloat16)
    x = jnp.concatenate([zrow, cat, zrow], axis=1)         # (1, H+2, W,   Cin)
    zcol = jnp.zeros((1, H + 2, 1, Cin), jnp.bfloat16)
    x = jnp.concatenate([zcol, x, zcol], axis=2)           # (1, H+2, W+2, Cin)

    # im2col: 9 shifted taps -> ONE K = 9*Cin matmul on the MXU.
    taps = [x[:, dy:dy + H, dx:dx + W, :]
            for dy in range(3) for dx in range(3)]
    patches = jnp.concatenate(taps, axis=-1)               # (1, H, W, 9*Cin)

    acc = jax.lax.dot_general(
        patches, w_ref[...],
        dimension_numbers=(((3,), (0,)), ((), ())),
        preferred_element_type=jnp.float32)                # (1, H, W, Cout)

    # Folded conv-bias + BatchNorm(eval) + ReLU epilogue (one FMA + max).
    scale = scale_ref[...].reshape(1, 1, 1, Cout)
    shift = shift_ref[...].reshape(1, 1, 1, Cout)
    y = acc * scale + shift
    out_ref[...] = jnp.maximum(y, 0.0).astype(out_ref.dtype)


# --------------------------------------------------------------------------
# Wrapper
# --------------------------------------------------------------------------
def _nearest_resize_nhwc(x, h, w):
    # torch.nn.functional.interpolate default mode='nearest':
    #   src = floor(dst * in_size / out_size)
    # TODO(synk): could be folded into the kernel via scalar-prefetched
    #             row/col index tables to save one more HBM pass.
    h_in, w_in = x.shape[1], x.shape[2]
    rows = jnp.floor(jnp.arange(h) * (h_in / h)).astype(jnp.int32)
    cols = jnp.floor(jnp.arange(w) * (w_in / w)).astype(jnp.int32)
    return x[:, rows][:, :, cols]


@functools.partial(jax.jit, static_argnames=("channel", "low_channel"))
def cf_module_forward(feature_nchw, low_feature_nchw, params, *,
                      channel, low_channel):
    """Pallas implementation of cf_module.forward.  Inputs/outputs are NCHW."""
    N, C, H, W = feature_nchw.shape
    assert C == channel

    feat = jnp.transpose(feature_nchw, (0, 2, 3, 1)).astype(jnp.float32)
    low = jnp.transpose(low_feature_nchw, (0, 2, 3, 1)).astype(jnp.float32)
    low = _nearest_resize_nhwc(low, H, W)                  # (N, H, W, Cl)

    c_in = channel + low_channel
    c_out = channel

    # im2col weight layout: row index = (dy*3+dx)*Cin + cin, matching the
    # kernel's tap concatenation order.  OIHW -> (9*Cin, Cout), cast to bf16.
    w = params["conv_w"]                                   # (Cout, Cin, 3, 3)
    w_im2col = jnp.transpose(w, (2, 3, 1, 0)).reshape(9 * c_in, c_out)
    w_im2col = w_im2col.astype(jnp.bfloat16)

    # Fold conv bias + eval BatchNorm into a single scale/shift pair:
    #   (conv + b) * s + (beta - mean*s)  ==  conv*s + (beta + (b - mean)*s)
    eps = 1e-5
    bn_scale = params["bn_gamma"] / jnp.sqrt(params["bn_var"] + eps)
    fused_shift = params["bn_beta"] + (params["conv_b"] - params["bn_mean"]) * bn_scale
    scale = bn_scale.reshape(1, c_out).astype(jnp.float32)
    shift = fused_shift.reshape(1, c_out).astype(jnp.float32)

    # TODO(synk): for production H/W add an H-tile grid axis with halo rows
    #             (element-offset index_map or manual DMA); grid is batch-only
    #             here, which is sufficient (and VMEM-safe) at these shapes.
    out_nhwc = pl.pallas_call(
        _cf_fused_kernel,
        out_shape=jax.ShapeDtypeStruct((N, H, W, c_out), jnp.float32),
        grid_spec=pltpu.PrefetchScalarGridSpec(
            num_scalar_prefetch=0,
            grid=(N,),
            in_specs=[
                pl.BlockSpec((1, H, W, channel), lambda n: (n, 0, 0, 0)),
                pl.BlockSpec((1, H, W, low_channel), lambda n: (n, 0, 0, 0)),
                pl.BlockSpec((9 * c_in, c_out), lambda n: (0, 0)),      # resident
                pl.BlockSpec((1, c_out), lambda n: (0, 0)),             # resident
                pl.BlockSpec((1, c_out), lambda n: (0, 0)),             # resident
            ],
            out_specs=pl.BlockSpec((1, H, W, c_out), lambda n: (n, 0, 0, 0)),
        ),
        compiler_params=pltpu.CompilerParams(
            dimension_semantics=("parallel",),
            vmem_limit_bytes=32 * 1024 * 1024),
    )(feat, low, w_im2col, scale, shift)

    return jnp.transpose(out_nhwc, (0, 3, 1, 2))           # back to NCHW


# --------------------------------------------------------------------------
# Pure-JAX f32 reference (correctness check only)
# --------------------------------------------------------------------------
def _reference(feature_nchw, low_feature_nchw, params, channel, low_channel):
    N, C, H, W = feature_nchw.shape
    feat = jnp.transpose(feature_nchw, (0, 2, 3, 1))
    low = jnp.transpose(low_feature_nchw, (0, 2, 3, 1))
    low = _nearest_resize_nhwc(low, H, W)
    gate = jax.nn.sigmoid(jnp.mean(low, axis=-1, keepdims=True))
    cat = jnp.concatenate([gate * feat, low], axis=-1)

    w_hwio = jnp.transpose(params["conv_w"], (2, 3, 1, 0))
    y = jax.lax.conv_general_dilated(
        cat, w_hwio, window_strides=(1, 1), padding="SAME",
        dimension_numbers=("NHWC", "HWIO", "NHWC"))
    y = y + params["conv_b"].reshape(1, 1, 1, -1)
    eps = 1e-5
    scale = params["bn_gamma"] / jnp.sqrt(params["bn_var"] + eps)
    shift = params["bn_beta"] - params["bn_mean"] * scale
    y = y * scale.reshape(1, 1, 1, -1) + shift.reshape(1, 1, 1, -1)
    y = jnp.maximum(y, 0.0)
    return jnp.transpose(y, (0, 3, 1, 2))


# --------------------------------------------------------------------------
if __name__ == "__main__":
    channel, low_channel = 8, 8
    N, H, W = 2, 16, 16
    Hl, Wl = 8, 8
    c_in, c_out = channel + low_channel, channel

    key = jax.random.PRNGKey(0)
    k_feat, k_low, k_w, k_b, k_g, k_beta = jax.random.split(key, 6)

    feature = jax.random.normal(k_feat, (N, channel, H, W), jnp.float32)
    low_feature = jax.random.normal(k_low, (N, low_channel, Hl, Wl), jnp.float32)

    params = {
        "conv_w": jax.random.normal(k_w, (c_out, c_in, 3, 3), jnp.float32) * 0.1,
        "conv_b": jax.random.normal(k_b, (c_out,), jnp.float32) * 0.1,
        "bn_gamma": 1.0 + 0.1 * jax.random.normal(k_g, (c_out,), jnp.float32),
        "bn_beta": 0.1 * jax.random.normal(k_beta, (c_out,), jnp.float32),
        "bn_mean": jnp.zeros((c_out,), jnp.float32),
        "bn_var": jnp.ones((c_out,), jnp.float32),
    }

    out = cf_module_forward(feature, low_feature, params,
                            channel=channel, low_channel=low_channel)
    out = jax.block_until_ready(out)

    ref = _reference(feature, low_feature, params, channel, low_channel)
    # Kernel does the matmul in bf16 (f32 accumulate) per TPU best practice;
    # compare against the f32 reference with bf16-level tolerance.
    np.testing.assert_allclose(np.asarray(out), np.asarray(ref),
                               rtol=3e-2, atol=3e-2)
    assert out.shape == (N, channel, H, W)

    print("KERNEL_OK")
</pallas_src>

<mosaic_0001>
module attributes {stable_mosaic.version = 11 : i64} {
  func.func @_cf_fused_kernel(%arg0: i32, %arg1: memref<1x16x16x8xf32, #tpu.memory_space<vmem>>, %arg2: memref<1x16x16x8xf32, #tpu.memory_space<vmem>>, %arg3: memref<144x8xbf16, #tpu.memory_space<vmem>>, %arg4: memref<1x8xf32, #tpu.memory_space<vmem>>, %arg5: memref<1x8xf32, #tpu.memory_space<vmem>>, %arg6: memref<1x16x16x8xf32, #tpu.memory_space<vmem>>) attributes {dimension_semantics = [#tpu.dimension_semantics<parallel>], iteration_bounds = array<i64: 2>, scalar_prefetch = 0 : i64, scratch_operands = 0 : i64, tpu.core_type = #tpu.core_type<tc>, window_params = [{transform_indices = @transform_0, window_bounds = array<i64: 1, 16, 16, 8>}, {transform_indices = @transform_1, window_bounds = array<i64: 1, 16, 16, 8>}, {pipeline_mode = #tpu.pipeline_mode<synchronous>, transform_indices = @transform_2, window_bounds = array<i64: 144, 8>}, {pipeline_mode = #tpu.pipeline_mode<synchronous>, transform_indices = @transform_3, window_bounds = array<i64: 1, 8>}, {pipeline_mode = #tpu.pipeline_mode<synchronous>, transform_indices = @transform_4, window_bounds = array<i64: 1, 8>}, {transform_indices = @transform_5, window_bounds = array<i64: 1, 16, 16, 8>}]} {
    %c0 = arith.constant 0 : index
    %c0_0 = arith.constant 0 : index
    %c0_1 = arith.constant 0 : index
    %c0_2 = arith.constant 0 : index
    %0 = vector.load %arg1[%c0, %c0_0, %c0_1, %c0_2] : memref<1x16x16x8xf32, #tpu.memory_space<vmem>>, vector<1x16x16x8xf32>
    %c0_3 = arith.constant 0 : index
    %c0_4 = arith.constant 0 : index
    %c0_5 = arith.constant 0 : index
    %c0_6 = arith.constant 0 : index
    %1 = vector.load %arg2[%c0_3, %c0_4, %c0_5, %c0_6] : memref<1x16x16x8xf32, #tpu.memory_space<vmem>>, vector<1x16x16x8xf32>
    %cst = arith.constant dense<0.000000e+00> : vector<1x16x16xf32>
    %2 = vector.multi_reduction <add>, %1, %cst [3] : vector<1x16x16x8xf32> to vector<1x16x16xf32>
    %3 = vector.shape_cast %2 : vector<1x16x16xf32> to vector<1x16x16x1xf32>
    %cst_7 = arith.constant 8.000000e+00 : f32
    %4 = vector.broadcast %cst_7 : f32 to vector<1x16x16x1xf32>
    %5 = arith.divf %3, %4 : vector<1x16x16x1xf32>
    %6 = arith.negf %5 : vector<1x16x16x1xf32>
    %7 = math.exp %6 : vector<1x16x16x1xf32>
    %cst_8 = arith.constant 1.000000e+00 : f32
    %8 = vector.broadcast %cst_8 : f32 to vector<1x16x16x1xf32>
    %9 = arith.addf %8, %7 : vector<1x16x16x1xf32>
    %10 = arith.divf %8, %9 : vector<1x16x16x1xf32>
    %11 = vector.broadcast %10 : vector<1x16x16x1xf32> to vector<1x16x16x8xf32>
    %12 = arith.mulf %11, %0 : vector<1x16x16x8xf32>
    %13 = arith.truncf %12 : vector<1x16x16x8xf32> to vector<1x16x16x8xbf16>
    %14 = arith.truncf %1 : vector<1x16x16x8xf32> to vector<1x16x16x8xbf16>
    %15 = tpu.concatenate %13, %14 in 3 : vector<1x16x16x8xbf16>, vector<1x16x16x8xbf16> -> vector<1x16x16x16xbf16>
    %cst_9 = arith.constant 0.000000e+00 : bf16
    %16 = vector.broadcast %cst_9 : bf16 to vector<1x1x16x16xbf16>
    %17 = tpu.concatenate %16, %15, %16 in 1 : vector<1x1x16x16xbf16>, vector<1x16x16x16xbf16>, vector<1x1x16x16xbf16> -> vector<1x18x16x16xbf16>
    %cst_10 = arith.constant 0.000000e+00 : bf16
    %18 = vector.broadcast %cst_10 : bf16 to vector<1x18x1x16xbf16>
    %19 = tpu.concatenate %18, %17, %18 in 2 : vector<1x18x1x16xbf16>, vector<1x18x16x16xbf16>, vector<1x18x1x16xbf16> -> vector<1x18x18x16xbf16>
    %20 = vector.extract_strided_slice %19 {offsets = [0, 0, 0, 0], sizes = [1, 16, 16, 16], strides = [1, 1, 1, 1]} : vector<1x18x18x16xbf16> to vector<1x16x16x16xbf16>
    %21 = vector.extract_strided_slice %19 {offsets = [0, 0, 1, 0], sizes = [1, 16, 16, 16], strides = [1, 1, 1, 1]} : vector<1x18x18x16xbf16> to vector<1x16x16x16xbf16>
    %22 = vector.extract_strided_slice %19 {offsets = [0, 0, 2, 0], sizes = [1, 16, 16, 16], strides = [1, 1, 1, 1]} : vector<1x18x18x16xbf16> to vector<1x16x16x16xbf16>
    %23 = vector.extract_strided_slice %19 {offsets = [0, 1, 0, 0], sizes = [1, 16, 16, 16], strides = [1, 1, 1, 1]} : vector<1x18x18x16xbf16> to vector<1x16x16x16xbf16>
    %24 = vector.extract_strided_slice %19 {offsets = [0, 1, 1, 0], sizes = [1, 16, 16, 16], strides = [1, 1, 1, 1]} : vector<1x18x18x16xbf16> to vector<1x16x16x16xbf16>
    %25 = vector.extract_strided_slice %19 {offsets = [0, 1, 2, 0], sizes = [1, 16, 16, 16], strides = [1, 1, 1, 1]} : vector<1x18x18x16xbf16> to vector<1x16x16x16xbf16>
    %26 = vector.extract_strided_slice %19 {offsets = [0, 2, 0, 0], sizes = [1, 16, 16, 16], strides = [1, 1, 1, 1]} : vector<1x18x18x16xbf16> to vector<1x16x16x16xbf16>
    %27 = vector.extract_strided_slice %19 {offsets = [0, 2, 1, 0], sizes = [1, 16, 16, 16], strides = [1, 1, 1, 1]} : vector<1x18x18x16xbf16> to vector<1x16x16x16xbf16>
    %28 = vector.extract_strided_slice %19 {offsets = [0, 2, 2, 0], sizes = [1, 16, 16, 16], strides = [1, 1, 1, 1]} : vector<1x18x18x16xbf16> to vector<1x16x16x16xbf16>
    %29 = tpu.concatenate %20, %21, %22, %23, %24, %25, %26, %27, %28 in 3 : vector<1x16x16x16xbf16>, vector<1x16x16x16xbf16>, vector<1x16x16x16xbf16>, vector<1x16x16x16xbf16>, vector<1x16x16x16xbf16>, vector<1x16x16x16xbf16>, vector<1x16x16x16xbf16>, vector<1x16x16x16xbf16>, vector<1x16x16x16xbf16> -> vector<1x16x16x144xbf16>
    %c0_11 = arith.constant 0 : index
    %c0_12 = arith.constant 0 : index
    %30 = vector.load %arg3[%c0_11, %c0_12] : memref<144x8xbf16, #tpu.memory_space<vmem>>, vector<144x8xbf16>
    %cst_13 = arith.constant dense<0.000000e+00> : vector<1x16x16x8xf32>
    %31 = tpu.matmul %29, %30, %cst_13 {dimension_numbers = #tpu.dot_dimension_numbers<[3], [0], [0, 1, 2], [1], [0, 0, 0, 1, 0, 2, 1, 1], [], []>} : vector<1x16x16x144xbf16>, vector<144x8xbf16>, vector<1x16x16x8xf32> -> vector<1x16x16x8xf32>
    %c0_14 = arith.constant 0 : index
    %c0_15 = arith.constant 0 : index
    %32 = vector.load %arg4[%c0_14, %c0_15] : memref<1x8xf32, #tpu.memory_space<vmem>>, vector<1x8xf32>
    %33 = vector.shape_cast %32 : vector<1x8xf32> to vector<1x1x1x8xf32>
    %c0_16 = arith.constant 0 : index
    %c0_17 = arith.constant 0 : index
    %34 = vector.load %arg5[%c0_16, %c0_17] : memref<1x8xf32, #tpu.memory_space<vmem>>, vector<1x8xf32>
    %35 = vector.shape_cast %34 : vector<1x8xf32> to vector<1x1x1x8xf32>
    %36 = vector.broadcast %33 : vector<1x1x1x8xf32> to vector<1x16x16x8xf32>
    %37 = arith.mulf %31, %36 : vector<1x16x16x8xf32>
    %38 = vector.broadcast %35 : vector<1x1x1x8xf32> to vector<1x16x16x8xf32>
    %39 = arith.addf %37, %38 : vector<1x16x16x8xf32>
    %cst_18 = arith.constant 0.000000e+00 : f32
    %40 = vector.broadcast %cst_18 : f32 to vector<1x16x16x8xf32>
    %41 = arith.maximumf %39, %40 : vector<1x16x16x8xf32>
    %c0_19 = arith.constant 0 : index
    %c0_20 = arith.constant 0 : index
    %c0_21 = arith.constant 0 : index
    %c0_22 = arith.constant 0 : index
    %42 = vector.load %arg6[%c0_19, %c0_20, %c0_21, %c0_22] : memref<1x16x16x8xf32, #tpu.memory_space<vmem>>, vector<1x16x16x8xf32>
    tpu.vector_store %arg6[%c0_19, %c0_20, %c0_21, %c0_22], %41 {strides = array<i32>} : memref<1x16x16x8xf32, #tpu.memory_space<vmem>>, vector<1x16x16x8xf32>,
    return
  }
  func.func @transform_0(%arg0: i32) -> (i32, i32, i32, i32) {
    %c0_i32 = arith.constant 0 : i32
    %c0_i32_0 = arith.constant 0 : i32
    %c0_i32_1 = arith.constant 0 : i32
    %c0_i32_2 = arith.constant 0 : i32
    return %arg0, %c0_i32, %c0_i32_0, %c0_i32_1 : i32, i32, i32, i32
  }
  func.func @transform_1(%arg0: i32) -> (i32, i32, i32, i32) {
    %c0_i32 = arith.constant 0 : i32
    %c0_i32_0 = arith.constant 0 : i32
    %c0_i32_1 = arith.constant 0 : i32
    %c0_i32_2 = arith.constant 0 : i32
    return %arg0, %c0_i32, %c0_i32_0, %c0_i32_1 : i32, i32, i32, i32
  }
  func.func @transform_2(%arg0: i32) -> (i32, i32) {
    %c0_i32 = arith.constant 0 : i32
    %c0_i32_0 = arith.constant 0 : i32
    %c0_i32_1 = arith.constant 0 : i32
    return %c0_i32, %c0_i32_0 : i32, i32
  }
  func.func @transform_3(%arg0: i32) -> (i32, i32) {
    %c0_i32 = arith.constant 0 : i32
    %c0_i32_0 = arith.constant 0 : i32
    %c0_i32_1 = arith.constant 0 : i32
    return %c0_i32, %c0_i32_0 : i32, i32
  }
  func.func @transform_4(%arg0: i32) -> (i32, i32) {
    %c0_i32 = arith.constant 0 : i32
    %c0_i32_0 = arith.constant 0 : i32
    %c0_i32_1 = arith.constant 0 : i32
    return %c0_i32, %c0_i32_0 : i32, i32
  }
  func.func @transform_5(%arg0: i32) -> (i32, i32, i32, i32) {
    %c0_i32 = arith.constant 0 : i32
    %c0_i32_0 = arith.constant 0 : i32
    %c0_i32_1 = arith.constant 0 : i32
    %c0_i32_2 = arith.constant 0 : i32
    return %arg0, %c0_i32, %c0_i32_0, %c0_i32_1 : i32, i32, i32, i32
  }
}

</mosaic_0001>

<llo_original>
// kernel: cf_module_forward.1
$region0: #{cf_module_forward.1}
  #allocation0 [shape = 'u32[]', space=smem, size = 0x4, offset = 0x4, fixed_abs, tag = 'smem constant byte address 0x4 - core index']
  #allocation1 [shape = 'u32[144,128]{1,0:T(1,128)}', space=vmem, size = 0x12000, scoped, tag = 'internal scratch']
  %s0 = inlined_call_operand.vmem [shape: f32[2,16,16,8], index: 0, kind: input, shape index: {}]
  %s1 = inlined_call_operand.vmem [shape: f32[2,16,16,8], index: 1, kind: input, shape index: {}]
  %s2 = inlined_call_operand.vmem [shape: bf16[144,8], index: 2, kind: input, shape index: {}]
  %s3 = inlined_call_operand.vmem [shape: f32[1,8], index: 3, kind: input, shape index: {}]
  %s4 = inlined_call_operand.vmem [shape: f32[1,8], index: 4, kind: input, shape index: {}]
  %s5 = inlined_call_operand.vmem [shape: f32[2,16,16,8], index: 5, kind: output, shape index: {}]
  %s6 = sld [smem:[#allocation0]]
  $region53: #{cf_module_forward.1} parent=0
    _
  %s8 = ssub.s32 1, %s6
  %s9 = scalar_select 0, %s8, %s6
  loop: start=0, step=1, limit=4
  $region2: #{cf_module_forward.1} parent=0 // loop_pre_header
    _
  $region3: #{cf_module_forward.1} parent=0 // loop_header
    %s11 = sphi 0, %s15
    %p12 = scmp.ge.s32.totalorder %s11, 4
    %s21 = sphi 0, %s23
    %s24 = sphi 0, %s21
    %s25 = sphi 0, %s24
    %s41 = sphi 0, %s25
    %s47 = sphi 0, %s49
    %s50 = sphi 0, %s47
    %s51 = sphi 0, %s50
    %s67 = sphi 0, %s51
    %s71 = sphi 0, %s71
    %s73 = sphi 0, %s71
    %s74 = sphi 0, %s73
    %s88 = sphi 0, %s74
    %s92 = sphi 0, %s92
    %s94 = sphi 0, %s92
    %s95 = sphi 0, %s94
    %s109 = sphi 0, %s95
    %s113 = sphi 0, %s113
    %s115 = sphi 0, %s113
    %s116 = sphi 0, %s115
    %s130 = sphi 0, %s116
    %s136 = sphi 0, %s138
    %s139 = sphi 0, %s136
    %s140 = sphi 0, %s139
    %s156 = sphi 0, %s140
  $region4: #{cf_module_forward.1} parent=0 // loop_header_branch
    %14 = sbr.rel (%p12) target = $region8
  $region5: #{cf_module_forward.1} parent=0 // loop_body
    %s16 = ssub.s32 %s11, 1
    %s17 = ssub.s32 %s11, 2
    %s18 = sadd.s32 %s11, 1
    %s19 = ssub.s32 %s11, %s18
    %p20 = scmp.eq.s32.totalorder %s19, 0
    %s22 = sadd.s32 %s21, 1
    %s23 = scalar_select %p20, %s21, %s22
    %p26 = pneg %p20
    %p27 = scmp.eq.s32.totalorder %s11, 1
    %p28 = por %p26, %p27
    %p29 = scmp.ne.s32.totalorder %s21, %s24
    %p30 = scmp.eq.s32.totalorder %s11, 0
    %p31 = por %p29, %p30
    %p32 = scmp.ne.s32.totalorder %s21, %s24
    %p33 = scmp.eq.s32.totalorder %s16, 1
    %p34 = por %p32, %p33
    %p35 = scmp.ne.s32.totalorder %s24, %s25
    %p36 = scmp.eq.s32.totalorder %s16, 0
    %p37 = por %p35, %p36
    %p38 = scmp.ne.s32.totalorder %s24, %s25
    %p39 = scmp.eq.s32.totalorder %s17, 1
    %p40 = por %p38, %p39
    %p42 = scmp.ne.s32.totalorder %s25, %s41
    %p43 = scmp.eq.s32.totalorder %s17, 0
    %p44 = por %p42, %p43
    %s45 = ssub.s32 %s11, %s18
    %p46 = scmp.eq.s32.totalorder %s45, 0
    %s48 = sadd.s32 %s47, 1
    %s49 = scalar_select %p46, %s47, %s48
    %p52 = pneg %p46
    %p53 = scmp.eq.s32.totalorder %s11, 1
    %p54 = por %p52, %p53
    %p55 = scmp.ne.s32.totalorder %s47, %s50
    %p56 = scmp.eq.s32.totalorder %s11, 0
    %p57 = por %p55, %p56
    %p58 = scmp.ne.s32.totalorder %s47, %s50
    %p59 = scmp.eq.s32.totalorder %s16, 1
    %p60 = por %p58, %p59
    %p61 = scmp.ne.s32.totalorder %s50, %s51
    %p62 = scmp.eq.s32.totalorder %s16, 0
    %p63 = por %p61, %p62
    %p64 = scmp.ne.s32.totalorder %s50, %s51
    %p65 = scmp.eq.s32.totalorder %s17, 1
    %p66 = por %p64, %p65
    %p68 = scmp.ne.s32.totalorder %s51, %s67
    %p69 = scmp.eq.s32.totalorder %s17, 0
    %p70 = por %p68, %p69
    %s72 = sadd.s32 %s71, 1
    %p75 = scmp.eq.s32.totalorder %s11, 1
    %p76 = scmp.ne.s32.totalorder %s71, %s73
    %p77 = scmp.eq.s32.totalorder %s11, 0
    %p78 = por %p76, %p77
    %p79 = scmp.ne.s32.totalorder %s71, %s73
    %p80 = scmp.eq.s32.totalorder %s16, 1
    %p81 = por %p79, %p80
    %p82 = scmp.ne.s32.totalorder %s73, %s74
    %p83 = scmp.eq.s32.totalorder %s16, 0
    %p84 = por %p82, %p83
    %p85 = scmp.ne.s32.totalorder %s73, %s74
    %p86 = scmp.eq.s32.totalorder %s17, 1
    %p87 = por %p85, %p86
    %p89 = scmp.ne.s32.totalorder %s74, %s88
    %p90 = scmp.eq.s32.totalorder %s17, 0
    %p91 = por %p89, %p90
    %s93 = sadd.s32 %s92, 1
    %p96 = scmp.eq.s32.totalorder %s11, 1
    %p97 = scmp.ne.s32.totalorder %s92, %s94
    %p98 = scmp.eq.s32.totalorder %s11, 0
    %p99 = por %p97, %p98
    %p100 = scmp.ne.s32.totalorder %s92, %s94
    %p101 = scmp.eq.s32.totalorder %s16, 1
    %p102 = por %p100, %p101
    %p103 = scmp.ne.s32.totalorder %s94, %s95
    %p104 = scmp.eq.s32.totalorder %s16, 0
    %p105 = por %p103, %p104
    %p106 = scmp.ne.s32.totalorder %s94, %s95
    %p107 = scmp.eq.s32.totalorder %s17, 1
    %p108 = por %p106, %p107
    %p110 = scmp.ne.s32.totalorder %s95, %s109
    %p111 = scmp.eq.s32.totalorder %s17, 0
    %p112 = por %p110, %p111
    %s114 = sadd.s32 %s113, 1
    %p117 = scmp.eq.s32.totalorder %s11, 1
    %p118 = scmp.ne.s32.totalorder %s113, %s115
    %p119 = scmp.eq.s32.totalorder %s11, 0
    %p120 = por %p118, %p119
    %p121 = scmp.ne.s32.totalorder %s113, %s115
    %p122 = scmp.eq.s32.totalorder %s16, 1
    %p123 = por %p121, %p122
    %p124 = scmp.ne.s32.totalorder %s115, %s116
    %p125 = scmp.eq.s32.totalorder %s16, 0
    %p126 = por %p124, %p125
    %p127 = scmp.ne.s32.totalorder %s115, %s116
    %p128 = scmp.eq.s32.totalorder %s17, 1
    %p129 = por %p127, %p128
    %p131 = scmp.ne.s32.totalorder %s116, %s130
    %p132 = scmp.eq.s32.totalorder %s17, 0
    %p133 = por %p131, %p132
    %s134 = ssub.s32 %s11, %s18
    %p135 = scmp.eq.s32.totalorder %s134, 0
    %s137 = sadd.s32 %s136, 1
    %s138 = scalar_select %p135, %s136, %s137
    %p141 = pneg %p135
    %p142 = scmp.eq.s32.totalorder %s11, 1
    %p143 = por %p141, %p142
    %p144 = scmp.ne.s32.totalorder %s136, %s139
    %p145 = scmp.eq.s32.totalorder %s11, 0
    %p146 = por %p144, %p145
    %p147 = scmp.ne.s32.totalorder %s136, %s139
    %p148 = scmp.eq.s32.totalorder %s16, 1
    %p149 = por %p147, %p148
    %p150 = scmp.ne.s32.totalorder %s139, %s140
    %p151 = scmp.eq.s32.totalorder %s16, 0
    %p152 = por %p150, %p151
    %p153 = scmp.ne.s32.totalorder %s139, %s140
    %p154 = scmp.eq.s32.totalorder %s17, 1
    %p155 = por %p153, %p154
    %p157 = scmp.ne.s32.totalorder %s140, %s156
    %p158 = scmp.eq.s32.totalorder %s17, 0
    %p159 = por %p157, %p158
    %p160 = scmp.le.s32.totalorder 1, %s11
    %p161 = scmp.lt.s32.totalorder %s11, 3
    %p162 = pnand %p160, %p161
    %p163 = pneg %p162
    // Predicated region
    $region9: #{cf_module_forward.1} parent=5 // pred_check
      _
    $region10: #{cf_module_forward.1} parent=5 // pred_check_branch
      %165 = sbr.rel (%p162) target = $region12
    $region11: #{cf_module_forward.1} parent=5 // pred_region
      %s166 = ssub.s32 %s11, 1
      // Predicated region
      $region13: #{cf_module_forward.1} parent=11 // pred_check
        %p167 = pneg %p84
      $region14: #{cf_module_forward.1} parent=11 // pred_check_branch
        %169 = sbr.rel (%p167) target = $region16
      $region15: #{cf_module_forward.1} parent=11 // pred_region
        _
      $region16: #{cf_module_forward.1} parent=11 // pred_fallthru
        _
      // Predicated region
      $region17: #{cf_module_forward.1} parent=11 // pred_check
        %p170 = pneg %p105
      $region18: #{cf_module_forward.1} parent=11 // pred_check_branch
        %172 = sbr.rel (%p170) target = $region20
      $region19: #{cf_module_forward.1} parent=11 // pred_region
        _
      $region20: #{cf_module_forward.1} parent=11 // pred_fallthru
        _
      // Predicated region
      $region21: #{cf_module_forward.1} parent=11 // pred_check
        %p173 = pneg %p126
      $region22: #{cf_module_forward.1} parent=11 // pred_check_branch
        %175 = sbr.rel (%p173) target = $region24
      $region23: #{cf_module_forward.1} parent=11 // pred_region
        _
      $region24: #{cf_module_forward.1} parent=11 // pred_fallthru
        _
    $region12: #{cf_module_forward.1} parent=5 // pred_fallthru
      _
    %p176 = scmp.lt.s32.totalorder %s11, 2
    // Predicated region
    $region25: #{cf_module_forward.1} parent=5 // pred_check
      %p177 = pneg %p176
    $region26: #{cf_module_forward.1} parent=5 // pred_check_branch
      %179 = sbr.rel (%p177) target = $region28
    $region27: #{cf_module_forward.1} parent=5 // pred_region
      // Predicated region
      $region29: #{cf_module_forward.1} parent=27 // pred_check
        %p180 = pneg %p31
      $region30: #{cf_module_forward.1} parent=27 // pred_check_branch
        %182 = sbr.rel (%p180) target = $region32
      $region31: #{cf_module_forward.1} parent=27 // pred_region
        %p183 = scmp.lt.s32.totalorder %s11, 1
        %s184 = scalar_select %p183, %s11, 1
        %s185 = smul.addr %s184, 32
        %s186 = smul.addr %s185, 8
        %s187 = scalar_lea.vmem %s0, %s186
      $region32: #{cf_module_forward.1} parent=27 // pred_fallthru
        _
      // Predicated region
      $region33: #{cf_module_forward.1} parent=27 // pred_check
        %p188 = pneg %p57
      $region34: #{cf_module_forward.1} parent=27 // pred_check_branch
        %190 = sbr.rel (%p188) target = $region36
      $region35: #{cf_module_forward.1} parent=27 // pred_region
        %p191 = scmp.lt.s32.totalorder %s11, 1
        %s192 = scalar_select %p191, %s11, 1
        %s193 = smul.addr %s192, 32
        %s194 = smul.addr %s193, 8
        %s195 = scalar_lea.vmem %s1, %s194
      $region36: #{cf_module_forward.1} parent=27 // pred_fallthru
        _
    $region28: #{cf_module_forward.1} parent=5 // pred_fallthru
      _
    %p196 = scmp.le.s32.totalorder 1, %s11
    %p197 = scmp.lt.s32.totalorder %s11, 3
    %p198 = pnand %p196, %p197
    %p199 = pneg %p198
    // Predicated region
    $region37: #{cf_module_forward.1} parent=5 // pred_check
      _
    $region38: #{cf_module_forward.1} parent=5 // pred_check_branch
      %201 = sbr.rel (%p198) target = $region40
    $region39: #{cf_module_forward.1} parent=5 // pred_region
      %s202 = ssub.s32 %s11, 1
      %p203 = scmp.lt.s32.totalorder %s16, 1
      %s204 = scalar_select %p203, %s16, 1
      %s205 = smul.addr %s204, 32
      %s206 = smul.addr %s205, 8
      %s207 = scalar_lea.vmem %s0, %s206
      %p208 = pneg %p37
      %p209 = pneg %p34
      %p210 = scmp.lt.s32.totalorder %s16, 1
      %s211 = scalar_select %p210, %s16, 1
      %s212 = smul.addr %s211, 32
      %s213 = smul.addr %s212, 8
      %s214 = scalar_lea.vmem %s1, %s213
      %p215 = pneg %p63
      %p216 = pneg %p60
      %p217 = pneg %p84
      %p218 = pneg %p81
      %p219 = pneg %p105
      %p220 = pneg %p102
      %p221 = pneg %p126
      %p222 = pneg %p123
      %p223 = pneg %p152
      %p224 = pneg %p149
      %p225 = scmp.lt.s32.totalorder %s16, 1
      %s226 = scalar_select %p225, %s16, 1
      %s227 = smul.addr %s226, 32
      %s228 = smul.addr %s227, 8
      %s229 = scalar_lea.vmem %s5, %s228
      %p230 = scmp.lt.s32.totalorder %s16, 1
      %s231 = scalar_select %p230, %s16, 1
      %s232 = smul.addr %s231, 32
      %s233 = smul.addr %s232, 8
      %s234 = scalar_lea.vmem %s0, %s233
      %p235 = scmp.lt.s32.totalorder %s16, 1
      %s236 = scalar_select %p235, %s16, 1
      %s237 = smul.addr %s236, 32
      %s238 = smul.addr %s237, 8
      %s239 = scalar_lea.vmem %s1, %s238
      %p240 = scmp.lt.s32.totalorder %s16, 1
      %s241 = scalar_select %p240, %s16, 1
      %s242 = smul.addr %s241, 32
      %s243 = smul.addr %s242, 8
      %s244 = scalar_lea.vmem %s5, %s243
      %v246 = vld [vmem:[%s234] sm:$0xff]
      %v247 = vld [vmem:[%s234 + $0x8] sm:$0xff]
      %v248 = vld [vmem:[%s234 + $0x10] sm:$0xff]
      %v249 = vld [vmem:[%s234 + $0x18] sm:$0xff]
      %v250 = vld [vmem:[%s234 + $0x20] sm:$0xff]
      %v251 = vld [vmem:[%s234 + $0x28] sm:$0xff]
      %v252 = vld [vmem:[%s234 + $0x30] sm:$0xff]
      %v253 = vld [vmem:[%s234 + $0x38] sm:$0xff]
      %v254 = vld [vmem:[%s234 + $0x40] sm:$0xff]
      %v255 = vld [vmem:[%s234 + $0x48] sm:$0xff]
      %v256 = vld [vmem:[%s234 + $0x50] sm:$0xff]
      %v257 = vld [vmem:[%s234 + $0x58] sm:$0xff]
      %v258 = vld [vmem:[%s234 + $0x60] sm:$0xff]
      %v259 = vld [vmem:[%s234 + $0x68] sm:$0xff]
      %v260 = vld [vmem:[%s234 + $0x70] sm:$0xff]
      %v261 = vld [vmem:[%s234 + $0x78] sm:$0xff]
      %v262 = vld [vmem:[%s234 + $0x80] sm:$0xff]
      %v263 = vld [vmem:[%s234 + $0x88] sm:$0xff]
      %v264 = vld [vmem:[%s234 + $0x90] sm:$0xff]
      %v265 = vld [vmem:[%s234 + $0x98] sm:$0xff]
      %v266 = vld [vmem:[%s234 + $0xa0] sm:$0xff]
      %v267 = vld [vmem:[%s234 + $0xa8] sm:$0xff]
      %v268 = vld [vmem:[%s234 + $0xb0] sm:$0xff]
      %v269 = vld [vmem:[%s234 + $0xb8] sm:$0xff]
      %v270 = vld [vmem:[%s234 + $0xc0] sm:$0xff]
      %v271 = vld [vmem:[%s234 + $0xc8] sm:$0xff]
      %v272 = vld [vmem:[%s234 + $0xd0] sm:$0xff]
      %v273 = vld [vmem:[%s234 + $0xd8] sm:$0xff]
      %v274 = vld [vmem:[%s234 + $0xe0] sm:$0xff]
      %v275 = vld [vmem:[%s234 + $0xe8] sm:$0xff]
      %v276 = vld [vmem:[%s234 + $0xf0] sm:$0xff]
      %v277 = vld [vmem:[%s234 + $0xf8] sm:$0xff]
      %v278 = vld [vmem:[%s239] sm:$0xff]
      %v279 = vld [vmem:[%s239 + $0x8] sm:$0xff]
      %v280 = vld [vmem:[%s239 + $0x10] sm:$0xff]
      %v281 = vld [vmem:[%s239 + $0x18] sm:$0xff]
      %v282 = vld [vmem:[%s239 + $0x20] sm:$0xff]
      %v283 = vld [vmem:[%s239 + $0x28] sm:$0xff]
      %v284 = vld [vmem:[%s239 + $0x30] sm:$0xff]
      %v285 = vld [vmem:[%s239 + $0x38] sm:$0xff]
      %v286 = vld [vmem:[%s239 + $0x40] sm:$0xff]
      %v287 = vld [vmem:[%s239 + $0x48] sm:$0xff]
      %v288 = vld [vmem:[%s239 + $0x50] sm:$0xff]
      %v289 = vld [vmem:[%s239 + $0x58] sm:$0xff]
      %v290 = vld [vmem:[%s239 + $0x60] sm:$0xff]
      %v291 = vld [vmem:[%s239 + $0x68] sm:$0xff]
      %v292 = vld [vmem:[%s239 + $0x70] sm:$0xff]
      %v293 = vld [vmem:[%s239 + $0x78] sm:$0xff]
      %v294 = vld [vmem:[%s239 + $0x80] sm:$0xff]
      %v295 = vld [vmem:[%s239 + $0x88] sm:$0xff]
      %v296 = vld [vmem:[%s239 + $0x90] sm:$0xff]
      %v297 = vld [vmem:[%s239 + $0x98] sm:$0xff]
      %v298 = vld [vmem:[%s239 + $0xa0] sm:$0xff]
      %v299 = vld [vmem:[%s239 + $0xa8] sm:$0xff]
      %v300 = vld [vmem:[%s239 + $0xb0] sm:$0xff]
      %v301 = vld [vmem:[%s239 + $0xb8] sm:$0xff]
      %v302 = vld [vmem:[%s239 + $0xc0] sm:$0xff]
      %v303 = vld [vmem:[%s239 + $0xc8] sm:$0xff]
      %v304 = vld [vmem:[%s239 + $0xd0] sm:$0xff]
      %v305 = vld [vmem:[%s239 + $0xd8] sm:$0xff]
      %v306 = vld [vmem:[%s239 + $0xe0] sm:$0xff]
      %v307 = vld [vmem:[%s239 + $0xe8] sm:$0xff]
      %v308 = vld [vmem:[%s239 + $0xf0] sm:$0xff]
      %v309 = vld [vmem:[%s239 + $0xf8] sm:$0xff]
      %vm310 = vcmask 64512
      %v311 = vsel %vm310, %v278, 0.0
      %312 = vadd.xlane.f32.xlu0 %v311
      %v313 = vpop.xlane.xlu0 %312
      %v314 = vsel %vm310, %v279, 0.0
      %315 = vadd.xlane.f32.xlu0 %v314
      %v316 = vpop.xlane.xlu0 %315
      %v317 = vsel %vm310, %v280, 0.0
      %318 = vadd.xlane.f32.xlu0 %v317
      %v319 = vpop.xlane.xlu0 %318
      %v320 = vsel %vm310, %v281, 0.0
      %321 = vadd.xlane.f32.xlu0 %v320
      %v322 = vpop.xlane.xlu0 %321
      %v323 = vsel %vm310, %v282, 0.0
      %324 = vadd.xlane.f32.xlu0 %v323
      %v325 = vpop.xlane.xlu0 %324
      %v326 = vsel %vm310, %v283, 0.0
      %327 = vadd.xlane.f32.xlu0 %v326
      %v328 = vpop.xlane.xlu0 %327
      %v329 = vsel %vm310, %v284, 0.0
      %330 = vadd.xlane.f32.xlu0 %v329
      %v331 = vpop.xlane.xlu0 %330
      %v332 = vsel %vm310, %v285, 0.0
      %333 = vadd.xlane.f32.xlu0 %v332
      %v334 = vpop.xlane.xlu0 %333
      %v335 = vsel %vm310, %v286, 0.0
      %336 = vadd.xlane.f32.xlu0 %v335
      %v337 = vpop.xlane.xlu0 %336
      %v338 = vsel %vm310, %v287, 0.0
      %339 = vadd.xlane.f32.xlu0 %v338
      %v340 = vpop.xlane.xlu0 %339
      %v341 = vsel %vm310, %v288, 0.0
      %342 = vadd.xlane.f32.xlu0 %v341
      %v343 = vpop.xlane.xlu0 %342
      %v344 = vsel %vm310, %v289, 0.0
      %345 = vadd.xlane.f32.xlu0 %v344
      %v346 = vpop.xlane.xlu0 %345
      %v347 = vsel %vm310, %v290, 0.0
      %348 = vadd.xlane.f32.xlu0 %v347
      %v349 = vpop.xlane.xlu0 %348
      %v350 = vsel %vm310, %v291, 0.0
      %351 = vadd.xlane.f32.xlu0 %v350
      %v352 = vpop.xlane.xlu0 %351
      %v353 = vsel %vm310, %v292, 0.0
      %354 = vadd.xlane.f32.xlu0 %v353
      %v355 = vpop.xlane.xlu0 %354
      %v356 = vsel %vm310, %v293, 0.0
      %357 = vadd.xlane.f32.xlu0 %v356
      %v358 = vpop.xlane.xlu0 %357
      %v359 = vsel %vm310, %v294, 0.0
      %360 = vadd.xlane.f32.xlu0 %v359
      %v361 = vpop.xlane.xlu0 %360
      %v362 = vsel %vm310, %v295, 0.0
      %363 = vadd.xlane.f32.xlu0 %v362
      %v364 = vpop.xlane.xlu0 %363
      %v365 = vsel %vm310, %v296, 0.0
      %366 = vadd.xlane.f32.xlu0 %v365
      %v367 = vpop.xlane.xlu0 %366
      %v368 = vsel %vm310, %v297, 0.0
      %369 = vadd.xlane.f32.xlu0 %v368
      %v370 = vpop.xlane.xlu0 %369
      %v371 = vsel %vm310, %v298, 0.0
      %372 = vadd.xlane.f32.xlu0 %v371
      %v373 = vpop.xlane.xlu0 %372
      %v374 = vsel %vm310, %v299, 0.0
      %375 = vadd.xlane.f32.xlu0 %v374
      %v376 = vpop.xlane.xlu0 %375
      %v377 = vsel %vm310, %v300, 0.0
      %378 = vadd.xlane.f32.xlu0 %v377
      %v379 = vpop.xlane.xlu0 %378
      %v380 = vsel %vm310, %v301, 0.0
      %381 = vadd.xlane.f32.xlu0 %v380
      %v382 = vpop.xlane.xlu0 %381
      %v383 = vsel %vm310, %v302, 0.0
      %384 = vadd.xlane.f32.xlu0 %v383
      %v385 = vpop.xlane.xlu0 %384
      %v386 = vsel %vm310, %v303, 0.0
      %387 = vadd.xlane.f32.xlu0 %v386
      %v388 = vpop.xlane.xlu0 %387
      %v389 = vsel %vm310, %v304, 0.0
      %390 = vadd.xlane.f32.xlu0 %v389
      %v391 = vpop.xlane.xlu0 %390
      %v392 = vsel %vm310, %v305, 0.0
      %393 = vadd.xlane.f32.xlu0 %v392
      %v394 = vpop.xlane.xlu0 %393
      %v395 = vsel %vm310, %v306, 0.0
      %396 = vadd.xlane.f32.xlu0 %v395
      %v397 = vpop.xlane.xlu0 %396
      %v398 = vsel %vm310, %v307, 0.0
      %399 = vadd.xlane.f32.xlu0 %v398
      %v400 = vpop.xlane.xlu0 %399
      %v401 = vsel %vm310, %v308, 0.0
      %402 = vadd.xlane.f32.xlu0 %v401
      %v403 = vpop.xlane.xlu0 %402
      %v404 = vsel %vm310, %v309, 0.0
      %405 = vadd.xlane.f32.xlu0 %v404
      %v406 = vpop.xlane.xlu0 %405
      %v407 = vrcp.pop 8.0
      %v408 = vmul.f32 %v313, %v407
      %v409 = vmul.f32 %v316, %v407
      %v410 = vmul.f32 %v319, %v407
      %v411 = vmul.f32 %v322, %v407
      %v412 = vmul.f32 %v325, %v407
      %v413 = vmul.f32 %v328, %v407
      %v414 = vmul.f32 %v331, %v407
      %v415 = vmul.f32 %v334, %v407
      %v416 = vmul.f32 %v337, %v407
      %v417 = vmul.f32 %v340, %v407
      %v418 = vmul.f32 %v343, %v407
      %v419 = vmul.f32 %v346, %v407
      %v420 = vmul.f32 %v349, %v407
      %v421 = vmul.f32 %v352, %v407
      %v422 = vmul.f32 %v355, %v407
      %v423 = vmul.f32 %v358, %v407
      %v424 = vmul.f32 %v361, %v407
      %v425 = vmul.f32 %v364, %v407
      %v426 = vmul.f32 %v367, %v407
      %v427 = vmul.f32 %v370, %v407
      %v428 = vmul.f32 %v373, %v407
      %v429 = vmul.f32 %v376, %v407
      %v430 = vmul.f32 %v379, %v407
      %v431 = vmul.f32 %v382, %v407
      %v432 = vmul.f32 %v385, %v407
      %v433 = vmul.f32 %v388, %v407
      %v434 = vmul.f32 %v391, %v407
      %v435 = vmul.f32 %v394, %v407
      %v436 = vmul.f32 %v397, %v407
      %v437 = vmul.f32 %v400, %v407
      %v438 = vmul.f32 %v403, %v407
      %v439 = vmul.f32 %v406, %v407
      %v440 = vxor.u32 %v408, 2147483648
      %v441 = vxor.u32 %v409, 2147483648
      %v442 = vxor.u32 %v410, 2147483648
      %v443 = vxor.u32 %v411, 2147483648
      %v444 = vxor.u32 %v412, 2147483648
      %v445 = vxor.u32 %v413, 2147483648
      %v446 = vxor.u32 %v414, 2147483648
      %v447 = vxor.u32 %v415, 2147483648
      %v448 = vxor.u32 %v416, 2147483648
      %v449 = vxor.u32 %v417, 2147483648
      %v450 = vxor.u32 %v418, 2147483648
      %v451 = vxor.u32 %v419, 2147483648
      %v452 = vxor.u32 %v420, 2147483648
      %v453 = vxor.u32 %v421, 2147483648
      %v454 = vxor.u32 %v422, 2147483648
      %v455 = vxor.u32 %v423, 2147483648
      %v456 = vxor.u32 %v424, 2147483648
      %v457 = vxor.u32 %v425, 2147483648
      %v458 = vxor.u32 %v426, 2147483648
      %v459 = vxor.u32 %v427, 2147483648
      %v460 = vxor.u32 %v428, 2147483648
      %v461 = vxor.u32 %v429, 2147483648
      %v462 = vxor.u32 %v430, 2147483648
      %v463 = vxor.u32 %v431, 2147483648
      %v464 = vxor.u32 %v432, 2147483648
      %v465 = vxor.u32 %v433, 2147483648
      %v466 = vxor.u32 %v434, 2147483648
      %v467 = vxor.u32 %v435, 2147483648
      %v468 = vxor.u32 %v436, 2147483648
      %v469 = vxor.u32 %v437, 2147483648
      %v470 = vxor.u32 %v438, 2147483648
      %v471 = vxor.u32 %v439, 2147483648
      %v472 = vmul.f32 %v440, 1.442695
      %v473 = vpow.pop %v472
      %v474 = vmul.f32 %v441, 1.442695
      %v475 = vpow.pop %v474
      %v476 = vmul.f32 %v442, 1.442695
      %v477 = vpow.pop %v476
      %v478 = vmul.f32 %v443, 1.442695
      %v479 = vpow.pop %v478
      %v480 = vmul.f32 %v444, 1.442695
      %v481 = vpow.pop %v480
      %v482 = vmul.f32 %v445, 1.442695
      %v483 = vpow.pop %v482
      %v484 = vmul.f32 %v446, 1.442695
      %v485 = vpow.pop %v484
      %v486 = vmul.f32 %v447, 1.442695
      %v487 = vpow.pop %v486
      %v488 = vmul.f32 %v448, 1.442695
      %v489 = vpow.pop %v488
      %v490 = vmul.f32 %v449, 1.442695
      %v491 = vpow.pop %v490
      %v492 = vmul.f32 %v450, 1.442695
      %v493 = vpow.pop %v492
      %v494 = vmul.f32 %v451, 1.442695
      %v495 = vpow.pop %v494
      %v496 = vmul.f32 %v452, 1.442695
      %v497 = vpow.pop %v496
      %v498 = vmul.f32 %v453, 1.442695
      %v499 = vpow.pop %v498
      %v500 = vmul.f32 %v454, 1.442695
      %v501 = vpow.pop %v500
      %v502 = vmul.f32 %v455, 1.442695
      %v503 = vpow.pop %v502
      %v504 = vmul.f32 %v456, 1.442695
      %v505 = vpow.pop %v504
      %v506 = vmul.f32 %v457, 1.442695
      %v507 = vpow.pop %v506
      %v508 = vmul.f32 %v458, 1.442695
      %v509 = vpow.pop %v508
      %v510 = vmul.f32 %v459, 1.442695
      %v511 = vpow.pop %v510
      %v512 = vmul.f32 %v460, 1.442695
      %v513 = vpow.pop %v512
      %v514 = vmul.f32 %v461, 1.442695
      %v515 = vpow.pop %v514
      %v516 = vmul.f32 %v462, 1.442695
      %v517 = vpow.pop %v516
      %v518 = vmul.f32 %v463, 1.442695
      %v519 = vpow.pop %v518
      %v520 = vmul.f32 %v464, 1.442695
      %v521 = vpow.pop %v520
      %v522 = vmul.f32 %v465, 1.442695
      %v523 = vpow.pop %v522
      %v524 = vmul.f32 %v466, 1.442695
      %v525 = vpow.pop %v524
      %v526 = vmul.f32 %v467, 1.442695
      %v527 = vpow.pop %v526
      %v528 = vmul.f32 %v468, 1.442695
      %v529 = vpow.pop %v528
      %v530 = vmul.f32 %v469, 1.442695
      %v531 = vpow.pop %v530
      %v532 = vmul.f32 %v470, 1.442695
      %v533 = vpow.pop %v532
      %v534 = vmul.f32 %v471, 1.442695
      %v535 = vpow.pop %v534
      %v536 = vadd.f32 %v473, 1.0
      %v537 = vadd.f32 %v475, 1.0
      %v538 = vadd.f32 %v477, 1.0
      %v539 = vadd.f32 %v479, 1.0
      %v540 = vadd.f32 %v481, 1.0
      %v541 = vadd.f32 %v483, 1.0
      %v542 = vadd.f32 %v485, 1.0
      %v543 = vadd.f32 %v487, 1.0
      %v544 = vadd.f32 %v489, 1.0
      %v545 = vadd.f32 %v491, 1.0
      %v546 = vadd.f32 %v493, 1.0
      %v547 = vadd.f32 %v495, 1.0
      %v548 = vadd.f32 %v497, 1.0
      %v549 = vadd.f32 %v499, 1.0
      %v550 = vadd.f32 %v501, 1.0
      %v551 = vadd.f32 %v503, 1.0
      %v552 = vadd.f32 %v505, 1.0
      %v553 = vadd.f32 %v507, 1.0
      %v554 = vadd.f32 %v509, 1.0
      %v555 = vadd.f32 %v511, 1.0
      %v556 = vadd.f32 %v513, 1.0
      %v557 = vadd.f32 %v515, 1.0
      %v558 = vadd.f32 %v517, 1.0
      %v559 = vadd.f32 %v519, 1.0
      %v560 = vadd.f32 %v521, 1.0
      %v561 = vadd.f32 %v523, 1.0
      %v562 = vadd.f32 %v525, 1.0
      %v563 = vadd.f32 %v527, 1.0
      %v564 = vadd.f32 %v529, 1.0
      %v565 = vadd.f32 %v531, 1.0
      %v566 = vadd.f32 %v533, 1.0
      %v567 = vadd.f32 %v535, 1.0
      %v568 = vrcp.pop %v536
      %v569 = vmul.f32 1.0, %v568
      %v570 = vrcp.pop %v537
      %v571 = vmul.f32 1.0, %v570
      %v572 = vrcp.pop %v538
      %v573 = vmul.f32 1.0, %v572
      %v574 = vrcp.pop %v539
      %v575 = vmul.f32 1.0, %v574
      %v576 = vrcp.pop %v540
      %v577 = vmul.f32 1.0, %v576
      %v578 = vrcp.pop %v541
      %v579 = vmul.f32 1.0, %v578
      %v580 = vrcp.pop %v542
      %v581 = vmul.f32 1.0, %v580
      %v582 = vrcp.pop %v543
      %v583 = vmul.f32 1.0, %v582
      %v584 = vrcp.pop %v544
      %v585 = vmul.f32 1.0, %v584
      %v586 = vrcp.pop %v545
      %v587 = vmul.f32 1.0, %v586
      %v588 = vrcp.pop %v546
      %v589 = vmul.f32 1.0, %v588
      %v590 = vrcp.pop %v547
      %v591 = vmul.f32 1.0, %v590
      %v592 = vrcp.pop %v548
      %v593 = vmul.f32 1.0, %v592
      %v594 = vrcp.pop %v549
      %v595 = vmul.f32 1.0, %v594
      %v596 = vrcp.pop %v550
      %v597 = vmul.f32 1.0, %v596
      %v598 = vrcp.pop %v551
      %v599 = vmul.f32 1.0, %v598
      %v600 = vrcp.pop %v552
      %v601 = vmul.f32 1.0, %v600
      %v602 = vrcp.pop %v553
      %v603 = vmul.f32 1.0, %v602
      %v604 = vrcp.pop %v554
      %v605 = vmul.f32 1.0, %v604
      %v606 = vrcp.pop %v555
      %v607 = vmul.f32 1.0, %v606
      %v608 = vrcp.pop %v556
      %v609 = vmul.f32 1.0, %v608
      %v610 = vrcp.pop %v557
      %v611 = vmul.f32 1.0, %v610
      %v612 = vrcp.pop %v558
      %v613 = vmul.f32 1.0, %v612
      %v614 = vrcp.pop %v559
      %v615 = vmul.f32 1.0, %v614
      %v616 = vrcp.pop %v560
      %v617 = vmul.f32 1.0, %v616
      %v618 = vrcp.pop %v561
      %v619 = vmul.f32 1.0, %v618
      %v620 = vrcp.pop %v562
      %v621 = vmul.f32 1.0, %v620
      %v622 = vrcp.pop %v563
      %v623 = vmul.f32 1.0, %v622
      %v624 = vrcp.pop %v564
      %v625 = vmul.f32 1.0, %v624
      %v626 = vrcp.pop %v565
      %v627 = vmul.f32 1.0, %v626
      %v628 = vrcp.pop %v566
      %v629 = vmul.f32 1.0, %v628
      %v630 = vrcp.pop %v567
      %v631 = vmul.f32 1.0, %v630
      %v632 = vmul.f32 %v569, %v246
      %v633 = vmul.f32 %v571, %v247
      %v634 = vmul.f32 %v573, %v248
      %v635 = vmul.f32 %v575, %v249
      %v636 = vmul.f32 %v577, %v250
      %v637 = vmul.f32 %v579, %v251
      %v638 = vmul.f32 %v581, %v252
      %v639 = vmul.f32 %v583, %v253
      %v640 = vmul.f32 %v585, %v254
      %v641 = vmul.f32 %v587, %v255
      %v642 = vmul.f32 %v589, %v256
      %v643 = vmul.f32 %v591, %v257
      %v644 = vmul.f32 %v593, %v258
      %v645 = vmul.f32 %v595, %v259
      %v646 = vmul.f32 %v597, %v260
      %v647 = vmul.f32 %v599, %v261
      %v648 = vmul.f32 %v601, %v262
      %v649 = vmul.f32 %v603, %v263
      %v650 = vmul.f32 %v605, %v264
      %v651 = vmul.f32 %v607, %v265
      %v652 = vmul.f32 %v609, %v266
      %v653 = vmul.f32 %v611, %v267
      %v654 = vmul.f32 %v613, %v268
      %v655 = vmul.f32 %v615, %v269
      %v656 = vmul.f32 %v617, %v270
      %v657 = vmul.f32 %v619, %v271
      %v658 = vmul.f32 %v621, %v272
      %v659 = vmul.f32 %v623, %v273
      %v660 = vmul.f32 %v625, %v274
      %v661 = vmul.f32 %v627, %v275
      %v662 = vmul.f32 %v629, %v276
      %v663 = vmul.f32 %v631, %v277
      %v664 = vpack.c.bf16 %v633, %v632
      %v665 = vpack.c.bf16 %v635, %v634
      %v666 = vpack.c.bf16 %v637, %v636
      %v667 = vpack.c.bf16 %v639, %v638
      %v668 = vpack.c.bf16 %v641, %v640
      %v669 = vpack.c.bf16 %v643, %v642
      %v670 = vpack.c.bf16 %v645, %v644
      %v671 = vpack.c.bf16 %v647, %v646
      %v672 = vpack.c.bf16 %v649, %v648
      %v673 = vpack.c.bf16 %v651, %v650
      %v674 = vpack.c.bf16 %v653, %v652
      %v675 = vpack.c.bf16 %v655, %v654
      %v676 = vpack.c.bf16 %v657, %v656
      %v677 = vpack.c.bf16 %v659, %v658
      %v678 = vpack.c.bf16 %v661, %v660
      %v679 = vpack.c.bf16 %v663, %v662
      %v680 = vpack.c.bf16 %v279, %v278
      %v681 = vpack.c.bf16 %v281, %v280
      %v682 = vpack.c.bf16 %v283, %v282
      %v683 = vpack.c.bf16 %v285, %v284
      %v684 = vpack.c.bf16 %v287, %v286
      %v685 = vpack.c.bf16 %v289, %v288
      %v686 = vpack.c.bf16 %v291, %v290
      %v687 = vpack.c.bf16 %v293, %v292
      %v688 = vpack.c.bf16 %v295, %v294
      %v689 = vpack.c.bf16 %v297, %v296
      %v690 = vpack.c.bf16 %v299, %v298
      %v691 = vpack.c.bf16 %v301, %v300
      %v692 = vpack.c.bf16 %v303, %v302
      %v693 = vpack.c.bf16 %v305, %v304
      %v694 = vpack.c.bf16 %v307, %v306
      %v695 = vpack.c.bf16 %v309, %v308
      %712 = vrot.lane.b32.xlu0 %v680, 8
      %v713 = vpop.permute.xlu0 %712
      %714 = vrot.lane.b32.xlu0 %v681, 8
      %v715 = vpop.permute.xlu0 %714
      %716 = vrot.lane.b32.xlu0 %v682, 8
      %v717 = vpop.permute.xlu0 %716
      %718 = vrot.lane.b32.xlu0 %v683, 8
      %v719 = vpop.permute.xlu0 %718
      %720 = vrot.lane.b32.xlu0 %v684, 8
      %v721 = vpop.permute.xlu0 %720
      %722 = vrot.lane.b32.xlu0 %v685, 8
      %v723 = vpop.permute.xlu0 %722
      %724 = vrot.lane.b32.xlu0 %v686, 8
      %v725 = vpop.permute.xlu0 %724
      %726 = vrot.lane.b32.xlu0 %v687, 8
      %v727 = vpop.permute.xlu0 %726
      %728 = vrot.lane.b32.xlu0 %v688, 8
      %v729 = vpop.permute.xlu0 %728
      %730 = vrot.lane.b32.xlu0 %v689, 8
      %v731 = vpop.permute.xlu0 %730
      %732 = vrot.lane.b32.xlu0 %v690, 8
      %v733 = vpop.permute.xlu0 %732
      %734 = vrot.lane.b32.xlu0 %v691, 8
      %v735 = vpop.permute.xlu0 %734
      %736 = vrot.lane.b32.xlu0 %v692, 8
      %v737 = vpop.permute.xlu0 %736
      %738 = vrot.lane.b32.xlu0 %v693, 8
      %v739 = vpop.permute.xlu0 %738
      %740 = vrot.lane.b32.xlu0 %v694, 8
      %v741 = vpop.permute.xlu0 %740
      %742 = vrot.lane.b32.xlu0 %v695, 8
      %v743 = vpop.permute.xlu0 %742
      %v746 = vsel %vm310, %v664, %v713
      %v749 = vsel %vm310, %v665, %v715
      %v752 = vsel %vm310, %v666, %v717
      %v755 = vsel %vm310, %v667, %v719
      %v758 = vsel %vm310, %v668, %v721
      %v761 = vsel %vm310, %v669, %v723
      %v764 = vsel %vm310, %v670, %v725
      %v767 = vsel %vm310, %v671, %v727
      %v770 = vsel %vm310, %v672, %v729
      %v773 = vsel %vm310, %v673, %v731
      %v776 = vsel %vm310, %v674, %v733
      %v779 = vsel %vm310, %v675, %v735
      %v782 = vsel %vm310, %v676, %v737
      %v785 = vsel %vm310, %v677, %v739
      %v788 = vsel %vm310, %v678, %v741
      %v791 = vsel %vm310, %v679, %v743
      %v793 = vshrl.u32 0, 16
      %v795 = vrot.slane %v793, 7
      %v796 = vshll.u32 0, 16
      %v798 = vor.u32 %v795, %v796
      %v799 = vshrl.u32 %v746, 16
      %v801 = vrot.slane %v799, 7
      %v802 = vshll.u32 %v746, 16
      %v804 = vor.u32 %v801, %v802
      %v805 = vshrl.u32 %v749, 16
      %v807 = vrot.slane %v805, 7
      %v808 = vshll.u32 %v749, 16
      %v810 = vor.u32 %v807, %v808
      %v811 = vshrl.u32 %v752, 16
      %v813 = vrot.slane %v811, 7
      %v814 = vshll.u32 %v752, 16
      %v816 = vor.u32 %v813, %v814
      %v817 = vshrl.u32 %v755, 16
      %v819 = vrot.slane %v817, 7
      %v820 = vshll.u32 %v755, 16
      %v822 = vor.u32 %v819, %v820
      %v823 = vshrl.u32 %v758, 16
      %v825 = vrot.slane %v823, 7
      %v826 = vshll.u32 %v758, 16
      %v828 = vor.u32 %v825, %v826
      %v829 = vshrl.u32 %v761, 16
      %v831 = vrot.slane %v829, 7
      %v832 = vshll.u32 %v761, 16
      %v834 = vor.u32 %v831, %v832
      %v835 = vshrl.u32 %v764, 16
      %v837 = vrot.slane %v835, 7
      %v838 = vshll.u32 %v764, 16
      %v840 = vor.u32 %v837, %v838
      %v841 = vshrl.u32 %v767, 16
      %v843 = vrot.slane %v841, 7
      %v844 = vshll.u32 %v767, 16
      %v846 = vor.u32 %v843, %v844
      %v847 = vshrl.u32 %v770, 16
      %v849 = vrot.slane %v847, 7
      %v850 = vshll.u32 %v770, 16
      %v852 = vor.u32 %v849, %v850
      %v853 = vshrl.u32 %v773, 16
      %v855 = vrot.slane %v853, 7
      %v856 = vshll.u32 %v773, 16
      %v858 = vor.u32 %v855, %v856
      %v859 = vshrl.u32 %v776, 16
      %v861 = vrot.slane %v859, 7
      %v862 = vshll.u32 %v776, 16
      %v864 = vor.u32 %v861, %v862
      %v865 = vshrl.u32 %v779, 16
      %v867 = vrot.slane %v865, 7
      %v868 = vshll.u32 %v779, 16
      %v870 = vor.u32 %v867, %v868
      %v871 = vshrl.u32 %v782, 16
      %v873 = vrot.slane %v871, 7
      %v874 = vshll.u32 %v782, 16
      %v876 = vor.u32 %v873, %v874
      %v877 = vshrl.u32 %v785, 16
      %v879 = vrot.slane %v877, 7
      %v880 = vshll.u32 %v785, 16
      %v882 = vor.u32 %v879, %v880
      %v883 = vshrl.u32 %v788, 16
      %v885 = vrot.slane %v883, 7
      %v886 = vshll.u32 %v788, 16
      %v888 = vor.u32 %v885, %v886
      %v889 = vshrl.u32 %v791, 16
      %v891 = vrot.slane %v889, 7
      %v892 = vshll.u32 %v791, 16
      %v894 = vor.u32 %v891, %v892
      %vm929 = vcmask 1040384
      %vm930 = vsmask.f32 256
      %vm931 = vmand %vm929, %vm930
      %v932 = vsel %vm931, 0, %v798
      %v933 = vsel %vm931, 0, %v804
      %v934 = vsel %vm931, 0, %v810
      %v935 = vsel %vm931, 0, %v816
      %v936 = vsel %vm931, 0, %v822
      %v937 = vsel %vm931, 0, %v828
      %v938 = vsel %vm931, 0, %v834
      %v939 = vsel %vm931, 0, %v840
      %v940 = vsel %vm931, 0, %v846
      %v941 = vsel %vm931, 0, %v852
      %v942 = vsel %vm931, 0, %v858
      %v943 = vsel %vm931, 0, %v864
      %v944 = vsel %vm931, 0, %v870
      %v945 = vsel %vm931, 0, %v876
      %v946 = vsel %vm931, 0, %v882
      %v947 = vsel %vm931, 0, %v888
      %v948 = vsel %vm931, 0, %v894
      %v949 = vsel %vm931, %v795, 0
      %v950 = vsel %vm931, %v801, 0
      %v951 = vsel %vm931, %v807, 0
      %v952 = vsel %vm931, %v813, 0
      %v953 = vsel %vm931, %v819, 0
      %v954 = vsel %vm931, %v825, 0
      %v955 = vsel %vm931, %v831, 0
      %v956 = vsel %vm931, %v837, 0
      %v957 = vsel %vm931, %v843, 0
      %v958 = vsel %vm931, %v849, 0
      %v959 = vsel %vm931, %v855, 0
      %v960 = vsel %vm931, %v861, 0
      %v961 = vsel %vm931, %v867, 0
      %v962 = vsel %vm931, %v873, 0
      %v963 = vsel %vm931, %v879, 0
      %v964 = vsel %vm931, %v885, 0
      %v965 = vsel %vm931, %v891, 0
      %vm966 = vsmask.f32 7424
      %v968 = vshrl.u32 %v932, 16
      %v970 = vshll.u32 %v932, 16
      %v972 = vrot.slane %v970, 1
      %v973 = vor.u32 %v968, %v972
      %v975 = vshll.u32 %v949, 16
      %v977 = vrot.slane %v975, 1
      %v978 = vsel %vm966, %v973, %v977
      %v980 = vshrl.u32 %v933, 16
      %v982 = vshll.u32 %v933, 16
      %v984 = vrot.slane %v982, 1
      %v985 = vor.u32 %v980, %v984
      %v987 = vshll.u32 %v950, 16
      %v989 = vrot.slane %v987, 1
      %v990 = vsel %vm966, %v985, %v989
      %v992 = vshrl.u32 %v934, 16
      %v994 = vshll.u32 %v934, 16
      %v996 = vrot.slane %v994, 1
      %v997 = vor.u32 %v992, %v996
      %v999 = vshll.u32 %v951, 16
      %v1001 = vrot.slane %v999, 1
      %v1002 = vsel %vm966, %v997, %v1001
      %v1004 = vshrl.u32 %v935, 16
      %v1006 = vshll.u32 %v935, 16
      %v1008 = vrot.slane %v1006, 1
      %v1009 = vor.u32 %v1004, %v1008
      %v1011 = vshll.u32 %v952, 16
      %v1013 = vrot.slane %v1011, 1
      %v1014 = vsel %vm966, %v1009, %v1013
      %v1016 = vshrl.u32 %v936, 16
      %v1018 = vshll.u32 %v936, 16
      %v1020 = vrot.slane %v1018, 1
      %v1021 = vor.u32 %v1016, %v1020
      %v1023 = vshll.u32 %v953, 16
      %v1025 = vrot.slane %v1023, 1
      %v1026 = vsel %vm966, %v1021, %v1025
      %v1028 = vshrl.u32 %v937, 16
      %v1030 = vshll.u32 %v937, 16
      %v1032 = vrot.slane %v1030, 1
      %v1033 = vor.u32 %v1028, %v1032
      %v1035 = vshll.u32 %v954, 16
      %v1037 = vrot.slane %v1035, 1
      %v1038 = vsel %vm966, %v1033, %v1037
      %v1040 = vshrl.u32 %v938, 16
      %v1042 = vshll.u32 %v938, 16
      %v1044 = vrot.slane %v1042, 1
      %v1045 = vor.u32 %v1040, %v1044
      %v1047 = vshll.u32 %v955, 16
      %v1049 = vrot.slane %v1047, 1
      %v1050 = vsel %vm966, %v1045, %v1049
      %v1052 = vshrl.u32 %v939, 16
      %v1054 = vshll.u32 %v939, 16
      %v1056 = vrot.slane %v1054, 1
      %v1057 = vor.u32 %v1052, %v1056
      %v1059 = vshll.u32 %v956, 16
      %v1061 = vrot.slane %v1059, 1
      %v1062 = vsel %vm966, %v1057, %v1061
      %v1064 = vshrl.u32 %v940, 16
      %v1066 = vshll.u32 %v940, 16
      %v1068 = vrot.slane %v1066, 1
      %v1069 = vor.u32 %v1064, %v1068
      %v1071 = vshll.u32 %v957, 16
      %v1073 = vrot.slane %v1071, 1
      %v1074 = vsel %vm966, %v1069, %v1073
      %v1076 = vshrl.u32 %v941, 16
      %v1078 = vshll.u32 %v941, 16
      %v1080 = vrot.slane %v1078, 1
      %v1081 = vor.u32 %v1076, %v1080
      %v1083 = vshll.u32 %v958, 16
      %v1085 = vrot.slane %v1083, 1
      %v1086 = vsel %vm966, %v1081, %v1085
      %v1088 = vshrl.u32 %v942, 16
      %v1090 = vshll.u32 %v942, 16
      %v1092 = vrot.slane %v1090, 1
      %v1093 = vor.u32 %v1088, %v1092
      %v1095 = vshll.u32 %v959, 16
      %v1097 = vrot.slane %v1095, 1
      %v1098 = vsel %vm966, %v1093, %v1097
      %v1100 = vshrl.u32 %v943, 16
      %v1102 = vshll.u32 %v943, 16
      %v1104 = vrot.slane %v1102, 1
      %v1105 = vor.u32 %v1100, %v1104
      %v1107 = vshll.u32 %v960, 16
      %v1109 = vrot.slane %v1107, 1
      %v1110 = vsel %vm966, %v1105, %v1109
      %v1112 = vshrl.u32 %v944, 16
      %v1114 = vshll.u32 %v944, 16
      %v1116 = vrot.slane %v1114, 1
      %v1117 = vor.u32 %v1112, %v1116
      %v1119 = vshll.u32 %v961, 16
      %v1121 = vrot.slane %v1119, 1
      %v1122 = vsel %vm966, %v1117, %v1121
      %v1124 = vshrl.u32 %v945, 16
      %v1126 = vshll.u32 %v945, 16
      %v1128 = vrot.slane %v1126, 1
      %v1129 = vor.u32 %v1124, %v1128
      %v1131 = vshll.u32 %v962, 16
      %v1133 = vrot.slane %v1131, 1
      %v1134 = vsel %vm966, %v1129, %v1133
      %v1136 = vshrl.u32 %v946, 16
      %v1138 = vshll.u32 %v946, 16
      %v1140 = vrot.slane %v1138, 1
      %v1141 = vor.u32 %v1136, %v1140
      %v1143 = vshll.u32 %v963, 16
      %v1145 = vrot.slane %v1143, 1
      %v1146 = vsel %vm966, %v1141, %v1145
      %v1148 = vshrl.u32 %v947, 16
      %v1150 = vshll.u32 %v947, 16
      %v1152 = vrot.slane %v1150, 1
      %v1153 = vor.u32 %v1148, %v1152
      %v1155 = vshll.u32 %v964, 16
      %v1157 = vrot.slane %v1155, 1
      %v1158 = vsel %vm966, %v1153, %v1157
      %1159 = vrot.lane.b32.xlu0 %v978, 16
      %v1160 = vpop.permute.xlu0 %1159
      %1161 = vrot.lane.b32.xlu0 %v990, 16
      %v1162 = vpop.permute.xlu0 %1161
      %1163 = vrot.lane.b32.xlu0 %v1002, 16
      %v1164 = vpop.permute.xlu0 %1163
      %1165 = vrot.lane.b32.xlu0 %v1014, 16
      %v1166 = vpop.permute.xlu0 %1165
      %1167 = vrot.lane.b32.xlu0 %v1026, 16
      %v1168 = vpop.permute.xlu0 %1167
      %1169 = vrot.lane.b32.xlu0 %v1038, 16
      %v1170 = vpop.permute.xlu0 %1169
      %1171 = vrot.lane.b32.xlu0 %v1050, 16
      %v1172 = vpop.permute.xlu0 %1171
      %1173 = vrot.lane.b32.xlu0 %v1062, 16
      %v1174 = vpop.permute.xlu0 %1173
      %1175 = vrot.lane.b32.xlu0 %v1074, 16
      %v1176 = vpop.permute.xlu0 %1175
      %1177 = vrot.lane.b32.xlu0 %v1086, 16
      %v1178 = vpop.permute.xlu0 %1177
      %1179 = vrot.lane.b32.xlu0 %v1098, 16
      %v1180 = vpop.permute.xlu0 %1179
      %1181 = vrot.lane.b32.xlu0 %v1110, 16
      %v1182 = vpop.permute.xlu0 %1181
      %1183 = vrot.lane.b32.xlu0 %v1122, 16
      %v1184 = vpop.permute.xlu0 %1183
      %1185 = vrot.lane.b32.xlu0 %v1134, 16
      %v1186 = vpop.permute.xlu0 %1185
      %1187 = vrot.lane.b32.xlu0 %v1146, 16
      %v1188 = vpop.permute.xlu0 %1187
      %1189 = vrot.lane.b32.xlu0 %v1158, 16
      %v1190 = vpop.permute.xlu0 %1189
      %vm1223 = vcmask 1046528
      %v1224 = vrot.slane %v932, 1
      %v1225 = vrot.slane %v949, 1
      %v1226 = vsel %vm1223, %v1224, %v1225
      %v1227 = vrot.slane %v933, 1
      %v1228 = vrot.slane %v950, 1
      %v1229 = vsel %vm1223, %v1227, %v1228
      %v1230 = vrot.slane %v934, 1
      %v1231 = vrot.slane %v951, 1
      %v1232 = vsel %vm1223, %v1230, %v1231
      %v1233 = vrot.slane %v935, 1
      %v1234 = vrot.slane %v952, 1
      %v1235 = vsel %vm1223, %v1233, %v1234
      %v1236 = vrot.slane %v936, 1
      %v1237 = vrot.slane %v953, 1
      %v1238 = vsel %vm1223, %v1236, %v1237
      %v1239 = vrot.slane %v937, 1
      %v1240 = vrot.slane %v954, 1
      %v1241 = vsel %vm1223, %v1239, %v1240
      %v1242 = vrot.slane %v938, 1
      %v1243 = vrot.slane %v955, 1
      %v1244 = vsel %vm1223, %v1242, %v1243
      %v1245 = vrot.slane %v939, 1
      %v1246 = vrot.slane %v956, 1
      %v1247 = vsel %vm1223, %v1245, %v1246
      %v1248 = vrot.slane %v940, 1
      %v1249 = vrot.slane %v957, 1
      %v1250 = vsel %vm1223, %v1248, %v1249
      %v1251 = vrot.slane %v941, 1
      %v1252 = vrot.slane %v958, 1
      %v1253 = vsel %vm1223, %v1251, %v1252
      %v1254 = vrot.slane %v942, 1
      %v1255 = vrot.slane %v959, 1
      %v1256 = vsel %vm1223, %v1254, %v1255
      %v1257 = vrot.slane %v943, 1
      %v1258 = vrot.slane %v960, 1
      %v1259 = vsel %vm1223, %v1257, %v1258
      %v1260 = vrot.slane %v944, 1
      %v1261 = vrot.slane %v961, 1
      %v1262 = vsel %vm1223, %v1260, %v1261
      %v1263 = vrot.slane %v945, 1
      %v1264 = vrot.slane %v962, 1
      %v1265 = vsel %vm1223, %v1263, %v1264
      %v1266 = vrot.slane %v946, 1
      %v1267 = vrot.slane %v963, 1
      %v1268 = vsel %vm1223, %v1266, %v1267
      %v1269 = vrot.slane %v947, 1
      %v1270 = vrot.slane %v964, 1
      %v1271 = vsel %vm1223, %v1269, %v1270
      %1272 = vrot.lane.b32.xlu0 %v1226, 32
      %v1273 = vpop.permute.xlu0 %1272
      %1274 = vrot.lane.b32.xlu0 %v1229, 32
      %v1275 = vpop.permute.xlu0 %1274
      %1276 = vrot.lane.b32.xlu0 %v1232, 32
      %v1277 = vpop.permute.xlu0 %1276
      %1278 = vrot.lane.b32.xlu0 %v1235, 32
      %v1279 = vpop.permute.xlu0 %1278
      %1280 = vrot.lane.b32.xlu0 %v1238, 32
      %v1281 = vpop.permute.xlu0 %1280
      %1282 = vrot.lane.b32.xlu0 %v1241, 32
      %v1283 = vpop.permute.xlu0 %1282
      %1284 = vrot.lane.b32.xlu0 %v1244, 32
      %v1285 = vpop.permute.xlu0 %1284
      %1286 = vrot.lane.b32.xlu0 %v1247, 32
      %v1287 = vpop.permute.xlu0 %1286
      %1288 = vrot.lane.b32.xlu0 %v1250, 32
      %v1289 = vpop.permute.xlu0 %1288
      %1290 = vrot.lane.b32.xlu0 %v1253, 32
      %v1291 = vpop.permute.xlu0 %1290
      %1292 = vrot.lane.b32.xlu0 %v1256, 32
      %v1293 = vpop.permute.xlu0 %1292
      %1294 = vrot.lane.b32.xlu0 %v1259, 32
      %v1295 = vpop.permute.xlu0 %1294
      %1296 = vrot.lane.b32.xlu0 %v1262, 32
      %v1297 = vpop.permute.xlu0 %1296
      %1298 = vrot.lane.b32.xlu0 %v1265, 32
      %v1299 = vpop.permute.xlu0 %1298
      %1300 = vrot.lane.b32.xlu0 %v1268, 32
      %v1301 = vpop.permute.xlu0 %1300
      %1302 = vrot.lane.b32.xlu0 %v1271, 32
      %v1303 = vpop.permute.xlu0 %1302
      %1305 = vrot.lane.b32.xlu0 %v933, 48
      %v1306 = vpop.permute.xlu0 %1305
      %1307 = vrot.lane.b32.xlu0 %v934, 48
      %v1308 = vpop.permute.xlu0 %1307
      %1309 = vrot.lane.b32.xlu0 %v935, 48
      %v1310 = vpop.permute.xlu0 %1309
      %1311 = vrot.lane.b32.xlu0 %v936, 48
      %v1312 = vpop.permute.xlu0 %1311
      %1313 = vrot.lane.b32.xlu0 %v937, 48
      %v1314 = vpop.permute.xlu0 %1313
      %1315 = vrot.lane.b32.xlu0 %v938, 48
      %v1316 = vpop.permute.xlu0 %1315
      %1317 = vrot.lane.b32.xlu0 %v939, 48
      %v1318 = vpop.permute.xlu0 %1317
      %1319 = vrot.lane.b32.xlu0 %v940, 48
      %v1320 = vpop.permute.xlu0 %1319
      %1321 = vrot.lane.b32.xlu0 %v941, 48
      %v1322 = vpop.permute.xlu0 %1321
      %1323 = vrot.lane.b32.xlu0 %v942, 48
      %v1324 = vpop.permute.xlu0 %1323
      %1325 = vrot.lane.b32.xlu0 %v943, 48
      %v1326 = vpop.permute.xlu0 %1325
      %1327 = vrot.lane.b32.xlu0 %v944, 48
      %v1328 = vpop.permute.xlu0 %1327
      %1329 = vrot.lane.b32.xlu0 %v945, 48
      %v1330 = vpop.permute.xlu0 %1329
      %1331 = vrot.lane.b32.xlu0 %v946, 48
      %v1332 = vpop.permute.xlu0 %1331
      %1333 = vrot.lane.b32.xlu0 %v947, 48
      %v1334 = vpop.permute.xlu0 %1333
      %1335 = vrot.lane.b32.xlu0 %v948, 48
      %v1336 = vpop.permute.xlu0 %1335
      %v1338 = vshrl.u32 %v948, 16
      %v1340 = vshll.u32 %v948, 16
      %v1342 = vrot.slane %v1340, 1
      %v1343 = vor.u32 %v1338, %v1342
      %v1345 = vshll.u32 %v965, 16
      %v1347 = vrot.slane %v1345, 1
      %v1348 = vsel %vm966, %v1343, %v1347
      %1349 = vrot.lane.b32.xlu0 %v990, 64
      %v1350 = vpop.permute.xlu0 %1349
      %1351 = vrot.lane.b32.xlu0 %v1002, 64
      %v1352 = vpop.permute.xlu0 %1351
      %1353 = vrot.lane.b32.xlu0 %v1014, 64
      %v1354 = vpop.permute.xlu0 %1353
      %1355 = vrot.lane.b32.xlu0 %v1026, 64
      %v1356 = vpop.permute.xlu0 %1355
      %1357 = vrot.lane.b32.xlu0 %v1038, 64
      %v1358 = vpop.permute.xlu0 %1357
      %1359 = vrot.lane.b32.xlu0 %v1050, 64
      %v1360 = vpop.permute.xlu0 %1359
      %1361 = vrot.lane.b32.xlu0 %v1062, 64
      %v1362 = vpop.permute.xlu0 %1361
      %1363 = vrot.lane.b32.xlu0 %v1074, 64
      %v1364 = vpop.permute.xlu0 %1363
      %1365 = vrot.lane.b32.xlu0 %v1086, 64
      %v1366 = vpop.permute.xlu0 %1365
      %1367 = vrot.lane.b32.xlu0 %v1098, 64
      %v1368 = vpop.permute.xlu0 %1367
      %1369 = vrot.lane.b32.xlu0 %v1110, 64
      %v1370 = vpop.permute.xlu0 %1369
      %1371 = vrot.lane.b32.xlu0 %v1122, 64
      %v1372 = vpop.permute.xlu0 %1371
      %1373 = vrot.lane.b32.xlu0 %v1134, 64
      %v1374 = vpop.permute.xlu0 %1373
      %1375 = vrot.lane.b32.xlu0 %v1146, 64
      %v1376 = vpop.permute.xlu0 %1375
      %1377 = vrot.lane.b32.xlu0 %v1158, 64
      %v1378 = vpop.permute.xlu0 %1377
      %1379 = vrot.lane.b32.xlu0 %v1348, 64
      %v1380 = vpop.permute.xlu0 %1379
      %v1382 = vrot.slane %v948, 1
      %v1383 = vrot.slane %v965, 1
      %v1384 = vsel %vm1223, %v1382, %v1383
      %1385 = vrot.lane.b32.xlu0 %v1229, 80
      %v1386 = vpop.permute.xlu0 %1385
      %1387 = vrot.lane.b32.xlu0 %v1232, 80
      %v1388 = vpop.permute.xlu0 %1387
      %1389 = vrot.lane.b32.xlu0 %v1235, 80
      %v1390 = vpop.permute.xlu0 %1389
      %1391 = vrot.lane.b32.xlu0 %v1238, 80
      %v1392 = vpop.permute.xlu0 %1391
      %1393 = vrot.lane.b32.xlu0 %v1241, 80
      %v1394 = vpop.permute.xlu0 %1393
      %1395 = vrot.lane.b32.xlu0 %v1244, 80
      %v1396 = vpop.permute.xlu0 %1395
      %1397 = vrot.lane.b32.xlu0 %v1247, 80
      %v1398 = vpop.permute.xlu0 %1397
      %1399 = vrot.lane.b32.xlu0 %v1250, 80
      %v1400 = vpop.permute.xlu0 %1399
      %1401 = vrot.lane.b32.xlu0 %v1253, 80
      %v1402 = vpop.permute.xlu0 %1401
      %1403 = vrot.lane.b32.xlu0 %v1256, 80
      %v1404 = vpop.permute.xlu0 %1403
      %1405 = vrot.lane.b32.xlu0 %v1259, 80
      %v1406 = vpop.permute.xlu0 %1405
      %1407 = vrot.lane.b32.xlu0 %v1262, 80
      %v1408 = vpop.permute.xlu0 %1407
      %1409 = vrot.lane.b32.xlu0 %v1265, 80
      %v1410 = vpop.permute.xlu0 %1409
      %1411 = vrot.lane.b32.xlu0 %v1268, 80
      %v1412 = vpop.permute.xlu0 %1411
      %1413 = vrot.lane.b32.xlu0 %v1271, 80
      %v1414 = vpop.permute.xlu0 %1413
      %1415 = vrot.lane.b32.xlu0 %v1384, 80
      %v1416 = vpop.permute.xlu0 %1415
      %1417 = vrot.lane.b32.xlu0 %v934, 96
      %v1418 = vpop.permute.xlu0 %1417
      %1419 = vrot.lane.b32.xlu0 %v935, 96
      %v1420 = vpop.permute.xlu0 %1419
      %1421 = vrot.lane.b32.xlu0 %v936, 96
      %v1422 = vpop.permute.xlu0 %1421
      %1423 = vrot.lane.b32.xlu0 %v937, 96
      %v1424 = vpop.permute.xlu0 %1423
      %1425 = vrot.lane.b32.xlu0 %v938, 96
      %v1426 = vpop.permute.xlu0 %1425
      %1427 = vrot.lane.b32.xlu0 %v939, 96
      %v1428 = vpop.permute.xlu0 %1427
      %1429 = vrot.lane.b32.xlu0 %v940, 96
      %v1430 = vpop.permute.xlu0 %1429
      %1431 = vrot.lane.b32.xlu0 %v941, 96
      %v1432 = vpop.permute.xlu0 %1431
      %1433 = vrot.lane.b32.xlu0 %v942, 96
      %v1434 = vpop.permute.xlu0 %1433
      %1435 = vrot.lane.b32.xlu0 %v943, 96
      %v1436 = vpop.permute.xlu0 %1435
      %1437 = vrot.lane.b32.xlu0 %v944, 96
      %v1438 = vpop.permute.xlu0 %1437
      %1439 = vrot.lane.b32.xlu0 %v945, 96
      %v1440 = vpop.permute.xlu0 %1439
      %1441 = vrot.lane.b32.xlu0 %v946, 96
      %v1442 = vpop.permute.xlu0 %1441
      %1443 = vrot.lane.b32.xlu0 %v947, 96
      %v1444 = vpop.permute.xlu0 %1443
      %1445 = vrot.lane.b32.xlu0 %v948, 96
      %v1446 = vpop.permute.xlu0 %1445
      %1447 = vrot.lane.b32.xlu0 %v932, 96
      %v1448 = vpop.permute.xlu0 %1447
      %1449 = vrot.lane.b32.xlu0 %v1002, 112
      %v1450 = vpop.permute.xlu0 %1449
      %1451 = vrot.lane.b32.xlu0 %v1014, 112
      %v1452 = vpop.permute.xlu0 %1451
      %1453 = vrot.lane.b32.xlu0 %v1026, 112
      %v1454 = vpop.permute.xlu0 %1453
      %1455 = vrot.lane.b32.xlu0 %v1038, 112
      %v1456 = vpop.permute.xlu0 %1455
      %1457 = vrot.lane.b32.xlu0 %v1050, 112
      %v1458 = vpop.permute.xlu0 %1457
      %1459 = vrot.lane.b32.xlu0 %v1062, 112
      %v1460 = vpop.permute.xlu0 %1459
      %1461 = vrot.lane.b32.xlu0 %v1074, 112
      %v1462 = vpop.permute.xlu0 %1461
      %1463 = vrot.lane.b32.xlu0 %v1086, 112
      %v1464 = vpop.permute.xlu0 %1463
      %1465 = vrot.lane.b32.xlu0 %v1098, 112
      %v1466 = vpop.permute.xlu0 %1465
      %1467 = vrot.lane.b32.xlu0 %v1110, 112
      %v1468 = vpop.permute.xlu0 %1467
      %1469 = vrot.lane.b32.xlu0 %v1122, 112
      %v1470 = vpop.permute.xlu0 %1469
      %1471 = vrot.lane.b32.xlu0 %v1134, 112
      %v1472 = vpop.permute.xlu0 %1471
      %1473 = vrot.lane.b32.xlu0 %v1146, 112
      %v1474 = vpop.permute.xlu0 %1473
      %1475 = vrot.lane.b32.xlu0 %v1158, 112
      %v1476 = vpop.permute.xlu0 %1475
      %1477 = vrot.lane.b32.xlu0 %v1348, 112
      %v1478 = vpop.permute.xlu0 %1477
      %1479 = vrot.lane.b32.xlu0 %v978, 112
      %v1480 = vpop.permute.xlu0 %1479
      %vm1481 = vcmask 130048
      %v1483 = vsel %vm1481, %v932, %v1160
      %v1485 = vsel %vm1481, %v933, %v1162
      %v1487 = vsel %vm1481, %v934, %v1164
      %v1489 = vsel %vm1481, %v935, %v1166
      %v1491 = vsel %vm1481, %v936, %v1168
      %v1493 = vsel %vm1481, %v937, %v1170
      %v1495 = vsel %vm1481, %v938, %v1172
      %v1497 = vsel %vm1481, %v939, %v1174
      %v1499 = vsel %vm1481, %v940, %v1176
      %v1501 = vsel %vm1481, %v941, %v1178
      %v1503 = vsel %vm1481, %v942, %v1180
      %v1505 = vsel %vm1481, %v943, %v1182
      %v1507 = vsel %vm1481, %v944, %v1184
      %v1509 = vsel %vm1481, %v945, %v1186
      %v1511 = vsel %vm1481, %v946, %v1188
      %v1513 = vsel %vm1481, %v947, %v1190
      %vm1514 = vcmask 261120
      %v1516 = vsel %vm1514, %v1483, %v1273
      %v1518 = vsel %vm1514, %v1485, %v1275
      %v1520 = vsel %vm1514, %v1487, %v1277
      %v1522 = vsel %vm1514, %v1489, %v1279
      %v1524 = vsel %vm1514, %v1491, %v1281
      %v1526 = vsel %vm1514, %v1493, %v1283
      %v1528 = vsel %vm1514, %v1495, %v1285
      %v1530 = vsel %vm1514, %v1497, %v1287
      %v1532 = vsel %vm1514, %v1499, %v1289
      %v1534 = vsel %vm1514, %v1501, %v1291
      %v1536 = vsel %vm1514, %v1503, %v1293
      %v1538 = vsel %vm1514, %v1505, %v1295
      %v1540 = vsel %vm1514, %v1507, %v1297
      %v1542 = vsel %vm1514, %v1509, %v1299
      %v1544 = vsel %vm1514, %v1511, %v1301
      %v1546 = vsel %vm1514, %v1513, %v1303
      %vm1547 = vcmask 392192
      %v1549 = vsel %vm1547, %v1516, %v1306
      %v1551 = vsel %vm1547, %v1518, %v1308
      %v1553 = vsel %vm1547, %v1520, %v1310
      %v1555 = vsel %vm1547, %v1522, %v1312
      %v1557 = vsel %vm1547, %v1524, %v1314
      %v1559 = vsel %vm1547, %v1526, %v1316
      %v1561 = vsel %vm1547, %v1528, %v1318
      %v1563 = vsel %vm1547, %v1530, %v1320
      %v1565 = vsel %vm1547, %v1532, %v1322
      %v1567 = vsel %vm1547, %v1534, %v1324
      %v1569 = vsel %vm1547, %v1536, %v1326
      %v1571 = vsel %vm1547, %v1538, %v1328
      %v1573 = vsel %vm1547, %v1540, %v1330
      %v1575 = vsel %vm1547, %v1542, %v1332
      %v1577 = vsel %vm1547, %v1544, %v1334
      %v1579 = vsel %vm1547, %v1546, %v1336
      %vm1580 = vcmask 523264
      %v1582 = vsel %vm1580, %v1549, %v1350
      %v1584 = vsel %vm1580, %v1551, %v1352
      %v1586 = vsel %vm1580, %v1553, %v1354
      %v1588 = vsel %vm1580, %v1555, %v1356
      %v1590 = vsel %vm1580, %v1557, %v1358
      %v1592 = vsel %vm1580, %v1559, %v1360
      %v1594 = vsel %vm1580, %v1561, %v1362
      %v1596 = vsel %vm1580, %v1563, %v1364
      %v1598 = vsel %vm1580, %v1565, %v1366
      %v1600 = vsel %vm1580, %v1567, %v1368
      %v1602 = vsel %vm1580, %v1569, %v1370
      %v1604 = vsel %vm1580, %v1571, %v1372
      %v1606 = vsel %vm1580, %v1573, %v1374
      %v1608 = vsel %vm1580, %v1575, %v1376
      %v1610 = vsel %vm1580, %v1577, %v1378
      %v1612 = vsel %vm1580, %v1579, %v1380
      %vm1613 = vcmask 654336
      %v1615 = vsel %vm1613, %v1582, %v1386
      %v1617 = vsel %vm1613, %v1584, %v1388
      %v1619 = vsel %vm1613, %v1586, %v1390
      %v1621 = vsel %vm1613, %v1588, %v1392
      %v1623 = vsel %vm1613, %v1590, %v1394
      %v1625 = vsel %vm1613, %v1592, %v1396
      %v1627 = vsel %vm1613, %v1594, %v1398
      %v1629 = vsel %vm1613, %v1596, %v1400
      %v1631 = vsel %vm1613, %v1598, %v1402
      %v1633 = vsel %vm1613, %v1600, %v1404
      %v1635 = vsel %vm1613, %v1602, %v1406
      %v1637 = vsel %vm1613, %v1604, %v1408
      %v1639 = vsel %vm1613, %v1606, %v1410
      %v1641 = vsel %vm1613, %v1608, %v1412
      %v1643 = vsel %vm1613, %v1610, %v1414
      %v1645 = vsel %vm1613, %v1612, %v1416
      %vm1646 = vcmask 785408
      %v1648 = vsel %vm1646, %v1615, %v1418
      %v1650 = vsel %vm1646, %v1617, %v1420
      %v1652 = vsel %vm1646, %v1619, %v1422
      %v1654 = vsel %vm1646, %v1621, %v1424
      %v1656 = vsel %vm1646, %v1623, %v1426
      %v1658 = vsel %vm1646, %v1625, %v1428
      %v1660 = vsel %vm1646, %v1627, %v1430
      %v1662 = vsel %vm1646, %v1629, %v1432
      %v1664 = vsel %vm1646, %v1631, %v1434
      %v1666 = vsel %vm1646, %v1633, %v1436
      %v1668 = vsel %vm1646, %v1635, %v1438
      %v1670 = vsel %vm1646, %v1637, %v1440
      %v1672 = vsel %vm1646, %v1639, %v1442
      %v1674 = vsel %vm1646, %v1641, %v1444
      %v1676 = vsel %vm1646, %v1643, %v1446
      %v1678 = vsel %vm1646, %v1645, %v1448
      %vm1679 = vcmask 916480
      %v1681 = vsel %vm1679, %v1648, %v1450
      %v1684 = vsel %vm1679, %v1650, %v1452
      %v1687 = vsel %vm1679, %v1652, %v1454
      %v1690 = vsel %vm1679, %v1654, %v1456
      %v1693 = vsel %vm1679, %v1656, %v1458
      %v1696 = vsel %vm1679, %v1658, %v1460
      %v1699 = vsel %vm1679, %v1660, %v1462
      %v1702 = vsel %vm1679, %v1662, %v1464
      %v1705 = vsel %vm1679, %v1664, %v1466
      %v1708 = vsel %vm1679, %v1666, %v1468
      %v1711 = vsel %vm1679, %v1668, %v1470
      %v1714 = vsel %vm1679, %v1670, %v1472
      %v1717 = vsel %vm1679, %v1672, %v1474
      %v1720 = vsel %vm1679, %v1674, %v1476
      %v1723 = vsel %vm1679, %v1676, %v1478
      %v1726 = vsel %vm1679, %v1678, %v1480
      %v1728 = vld [vmem:[%s2] sm:$0xf]
      %v1729 = vld [vmem:[%s2 + $0x4] sm:$0xf]
      %v1730 = vld [vmem:[%s2 + $0x8] sm:$0xf]
      %v1731 = vld [vmem:[%s2 + $0xc] sm:$0xf]
      %v1732 = vld [vmem:[%s2 + $0x10] sm:$0xf]
      %v1733 = vld [vmem:[%s2 + $0x14] sm:$0xf]
      %v1734 = vld [vmem:[%s2 + $0x18] sm:$0xf]
      %v1735 = vld [vmem:[%s2 + $0x1c] sm:$0xf]
      %v1736 = vld [vmem:[%s2 + $0x20] sm:$0xf]
      %v1737 = vld [vmem:[%s2 + $0x24] sm:$0xf]
      %v1738 = vld [vmem:[%s2 + $0x28] sm:$0xf]
      %v1739 = vld [vmem:[%s2 + $0x2c] sm:$0xf]
      %v1740 = vld [vmem:[%s2 + $0x30] sm:$0xf]
      %v1741 = vld [vmem:[%s2 + $0x34] sm:$0xf]
      %v1742 = vld [vmem:[%s2 + $0x38] sm:$0xf]
      %v1743 = vld [vmem:[%s2 + $0x3c] sm:$0xf]
      %v1744 = vld [vmem:[%s2 + $0x40] sm:$0xf]
      %v1745 = vld [vmem:[%s2 + $0x44] sm:$0xf]
      %v1764 = vunpack.c.l.b16 %v1728
      %v1765 = vunpack.c.l.b16 %v1729
      %v1766 = vunpack.c.l.b16 %v1730
      %v1767 = vunpack.c.l.b16 %v1731
      %v1768 = vunpack.c.l.b16 %v1732
      %v1769 = vunpack.c.l.b16 %v1733
      %v1770 = vunpack.c.l.b16 %v1734
      %v1771 = vunpack.c.l.b16 %v1735
      %v1772 = vunpack.c.l.b16 %v1736
      %v1773 = vunpack.c.l.b16 %v1737
      %v1774 = vunpack.c.l.b16 %v1738
      %v1775 = vunpack.c.l.b16 %v1739
      %v1776 = vunpack.c.l.b16 %v1740
      %v1777 = vunpack.c.l.b16 %v1741
      %v1778 = vunpack.c.l.b16 %v1742
      %v1779 = vunpack.c.l.b16 %v1743
      %v1780 = vunpack.c.l.b16 %v1744
      %v1781 = vunpack.c.l.b16 %v1745
      %v1782 = vpack.c.b16 %v1765, %v1764
      %v1783 = vpack.c.b16 %v1767, %v1766
      %v1784 = vpack.c.b16 %v1769, %v1768
      %v1785 = vpack.c.b16 %v1771, %v1770
      %v1786 = vpack.c.b16 %v1773, %v1772
      %v1787 = vpack.c.b16 %v1775, %v1774
      %v1788 = vpack.c.b16 %v1777, %v1776
      %v1789 = vpack.c.b16 %v1779, %v1778
      %v1790 = vpack.c.b16 %v1781, %v1780
      %v1801 = vsel %vm1481, %v1232, 0
      %v1804 = vsel %vm1481, %v1235, 0
      %v1807 = vsel %vm1481, %v1238, 0
      %v1810 = vsel %vm1481, %v1241, 0
      %v1813 = vsel %vm1481, %v1244, 0
      %v1816 = vsel %vm1481, %v1247, 0
      %v1819 = vsel %vm1481, %v1250, 0
      %v1822 = vsel %vm1481, %v1253, 0
      %v1825 = vsel %vm1481, %v1256, 0
      %v1828 = vsel %vm1481, %v1259, 0
      %v1831 = vsel %vm1481, %v1262, 0
      %v1834 = vsel %vm1481, %v1265, 0
      %v1837 = vsel %vm1481, %v1268, 0
      %v1840 = vsel %vm1481, %v1271, 0
      %v1843 = vsel %vm1481, %v1384, 0
      %v1846 = vsel %vm1481, %v1226, 0
      %1848 = vmatprep.subr.bf16.mxu0 0
      %1849 = vmatpush1.bf16.msra.mxu0 %v1782
      %1850 = vmatprep.subr.bf16.mxu0 0
      %1851 = vmatpush1.bf16.msra.mxu0 %v1783
      %1852 = vmatprep.subr.bf16.mxu0 0
      %1853 = vmatpush1.bf16.msra.mxu0 %v1784
      %1854 = vmatprep.subr.bf16.mxu0 0
      %1855 = vmatpush1.bf16.msra.mxu0 %v1785
      %1856 = vmatprep.subr.bf16.mxu0 0
      %1857 = vmatpush1.bf16.msra.mxu0 %v1786
      %1858 = vmatprep.subr.bf16.mxu0 0
      %1859 = vmatpush1.bf16.msra.mxu0 %v1787
      %1860 = vmatprep.subr.bf16.mxu0 0
      %1861 = vmatpush1.bf16.msra.mxu0 %v1788
      %1862 = vmatprep.subr.bf16.mxu0 0
      %1863 = vmatpush1.bf16.msra.mxu0 %v1789
      %1864 = vmatprep.subr.bf16.mxu0 0
      %1865 = vmatpush1.bf16.msra.mxu0 %v1790
      %1866 = vmatprep.subr.bf16.mxu0 0
      %1867 = vmatpush1.bf16.msra.mxu0 0
      %1868 = vmatprep.subr.bf16.mxu0 0
      %1869 = vmatpush1.bf16.msra.mxu0 0
      %1870 = vmatprep.subr.bf16.mxu0 0
      %1871 = vmatpush1.bf16.msra.mxu0 0
      %1872 = vmatprep.subr.bf16.mxu0 0
      %1873 = vmatpush1.bf16.msra.mxu0 0
      %1874 = vmatprep.subr.bf16.mxu0 0
      %1875 = vmatpush1.bf16.msra.mxu0 0
      %1876 = vmatprep.subr.bf16.mxu0 0
      %1877 = vmatpush1.bf16.msra.mxu0 0
      %1878 = vmatprep.subr.bf16.mxu0 0
      %1879 = vmatpush1.bf16.msra.mxu0 0
      %1880 = vmatprep.mubr.bf16.mxu0 %v1801
      %1881 = vmatmul.mubr.bf16.gmra.mrb[0].mxu0 %v1681
      %v1882 = vpop.f32.mrb[0].mxu0
      %v1883 = vadd.f32 0.0, %v1882
      %v1884 = vpop.f32.mrb[0].mxu0
      %v1885 = vpop.f32.mrb[0].mxu0
      %v1886 = vadd.f32 0.0, %v1885
      %v1887 = vpop.f32.mrb[0].mxu0
      %1888 = vmatprep.mubr.bf16.mxu0 %v1804
      %1889 = vmatmul.mubr.bf16.gmra.mrb[0].mxu0 %v1684
      %v1890 = vpop.f32.mrb[0].mxu0
      %v1891 = vadd.f32 0.0, %v1890
      %v1892 = vpop.f32.mrb[0].mxu0
      %v1893 = vpop.f32.mrb[0].mxu0
      %v1894 = vadd.f32 0.0, %v1893
      %v1895 = vpop.f32.mrb[0].mxu0
      %1896 = vmatprep.mubr.bf16.mxu0 %v1807
      %1897 = vmatmul.mubr.bf16.gmra.mrb[0].mxu0 %v1687
      %v1898 = vpop.f32.mrb[0].mxu0
      %v1899 = vadd.f32 0.0, %v1898
      %v1900 = vpop.f32.mrb[0].mxu0
      %v1901 = vpop.f32.mrb[0].mxu0
      %v1902 = vadd.f32 0.0, %v1901
      %v1903 = vpop.f32.mrb[0].mxu0
      %1904 = vmatprep.mubr.bf16.mxu0 %v1810
      %1905 = vmatmul.mubr.bf16.gmra.mrb[0].mxu0 %v1690
      %v1906 = vpop.f32.mrb[0].mxu0
      %v1907 = vadd.f32 0.0, %v1906
      %v1908 = vpop.f32.mrb[0].mxu0
      %v1909 = vpop.f32.mrb[0].mxu0
      %v1910 = vadd.f32 0.0, %v1909
      %v1911 = vpop.f32.mrb[0].mxu0
      %1912 = vmatprep.mubr.bf16.mxu0 %v1813
      %1913 = vmatmul.mubr.bf16.gmra.mrb[0].mxu0 %v1693
      %v1914 = vpop.f32.mrb[0].mxu0
      %v1915 = vadd.f32 0.0, %v1914
      %v1916 = vpop.f32.mrb[0].mxu0
      %v1917 = vpop.f32.mrb[0].mxu0
      %v1918 = vadd.f32 0.0, %v1917
      %v1919 = vpop.f32.mrb[0].mxu0
      %1920 = vmatprep.mubr.bf16.mxu0 %v1816
      %1921 = vmatmul.mubr.bf16.gmra.mrb[0].mxu0 %v1696
      %v1922 = vpop.f32.mrb[0].mxu0
      %v1923 = vadd.f32 0.0, %v1922
      %v1924 = vpop.f32.mrb[0].mxu0
      %v1925 = vpop.f32.mrb[0].mxu0
      %v1926 = vadd.f32 0.0, %v1925
      %v1927 = vpop.f32.mrb[0].mxu0
      %1928 = vmatprep.mubr.bf16.mxu0 %v1819
      %1929 = vmatmul.mubr.bf16.gmra.mrb[0].mxu0 %v1699
      %v1930 = vpop.f32.mrb[0].mxu0
      %v1931 = vadd.f32 0.0, %v1930
      %v1932 = vpop.f32.mrb[0].mxu0
      %v1933 = vpop.f32.mrb[0].mxu0
      %v1934 = vadd.f32 0.0, %v1933
      %v1935 = vpop.f32.mrb[0].mxu0
      %1936 = vmatprep.mubr.bf16.mxu0 %v1822
      %1937 = vmatmul.mubr.bf16.gmra.mrb[0].mxu0 %v1702
      %v1938 = vpop.f32.mrb[0].mxu0
      %v1939 = vadd.f32 0.0, %v1938
      %v1940 = vpop.f32.mrb[0].mxu0
      %v1941 = vpop.f32.mrb[0].mxu0
      %v1942 = vadd.f32 0.0, %v1941
      %v1943 = vpop.f32.mrb[0].mxu0
      %1944 = vmatprep.mubr.bf16.mxu0 %v1825
      %1945 = vmatmul.mubr.bf16.gmra.mrb[0].mxu0 %v1705
      %v1946 = vpop.f32.mrb[0].mxu0
      %v1947 = vadd.f32 0.0, %v1946
      %v1948 = vpop.f32.mrb[0].mxu0
      %v1949 = vpop.f32.mrb[0].mxu0
      %v1950 = vadd.f32 0.0, %v1949
      %v1951 = vpop.f32.mrb[0].mxu0
      %1952 = vmatprep.mubr.bf16.mxu0 %v1828
      %1953 = vmatmul.mubr.bf16.gmra.mrb[0].mxu0 %v1708
      %v1954 = vpop.f32.mrb[0].mxu0
      %v1955 = vadd.f32 0.0, %v1954
      %v1956 = vpop.f32.mrb[0].mxu0
      %v1957 = vpop.f32.mrb[0].mxu0
      %v1958 = vadd.f32 0.0, %v1957
      %v1959 = vpop.f32.mrb[0].mxu0
      %1960 = vmatprep.mubr.bf16.mxu0 %v1831
      %1961 = vmatmul.mubr.bf16.gmra.mrb[0].mxu0 %v1711
      %v1962 = vpop.f32.mrb[0].mxu0
      %v1963 = vadd.f32 0.0, %v1962
      %v1964 = vpop.f32.mrb[0].mxu0
      %v1965 = vpop.f32.mrb[0].mxu0
      %v1966 = vadd.f32 0.0, %v1965
      %v1967 = vpop.f32.mrb[0].mxu0
      %1968 = vmatprep.mubr.bf16.mxu0 %v1834
      %1969 = vmatmul.mubr.bf16.gmra.mrb[0].mxu0 %v1714
      %v1970 = vpop.f32.mrb[0].mxu0
      %v1971 = vadd.f32 0.0, %v1970
      %v1972 = vpop.f32.mrb[0].mxu0
      %v1973 = vpop.f32.mrb[0].mxu0
      %v1974 = vadd.f32 0.0, %v1973
      %v1975 = vpop.f32.mrb[0].mxu0
      %1976 = vmatprep.mubr.bf16.mxu0 %v1837
      %1977 = vmatmul.mubr.bf16.gmra.mrb[0].mxu0 %v1717
      %v1978 = vpop.f32.mrb[0].mxu0
      %v1979 = vadd.f32 0.0, %v1978
      %v1980 = vpop.f32.mrb[0].mxu0
      %v1981 = vpop.f32.mrb[0].mxu0
      %v1982 = vadd.f32 0.0, %v1981
      %v1983 = vpop.f32.mrb[0].mxu0
      %1984 = vmatprep.mubr.bf16.mxu0 %v1840
      %1985 = vmatmul.mubr.bf16.gmra.mrb[0].mxu0 %v1720
      %v1986 = vpop.f32.mrb[0].mxu0
      %v1987 = vadd.f32 0.0, %v1986
      %v1988 = vpop.f32.mrb[0].mxu0
      %v1989 = vpop.f32.mrb[0].mxu0
      %v1990 = vadd.f32 0.0, %v1989
      %v1991 = vpop.f32.mrb[0].mxu0
      %1992 = vmatprep.mubr.bf16.mxu0 %v1843
      %1993 = vmatmul.mubr.bf16.gmra.mrb[0].mxu0 %v1723
      %v1994 = vpop.f32.mrb[0].mxu0
      %v1995 = vadd.f32 0.0, %v1994
      %v1996 = vpop.f32.mrb[0].mxu0
      %v1997 = vpop.f32.mrb[0].mxu0
      %v1998 = vadd.f32 0.0, %v1997
      %v1999 = vpop.f32.mrb[0].mxu0
      %2000 = vmatprep.mubr.bf16.mxu0 %v1846
      %2001 = vmatmul.mubr.bf16.gmra.mrb[0].mxu0 %v1726
      %v2002 = vpop.f32.mrb[0].mxu0
      %v2003 = vadd.f32 0.0, %v2002
      %v2004 = vpop.f32.mrb[0].mxu0
      %v2005 = vpop.f32.mrb[0].mxu0
      %v2006 = vadd.f32 0.0, %v2005
      %v2007 = vpop.f32.mrb[0].mxu0
      %2008 = vdwg.mxu0
      %v2009 = vld [vmem:[%s3] sm:$0x1]
      %v2010 = vld [vmem:[%s4] sm:$0x1]
      %v2012 = vlaneseq
      %v2013 = vshrl.u32 %v2012, 7
      %v2014 = vsub.s32 0, %v2013
      %v2015 = vrot.slane %v2009, %v2014
      %v2017 = vmul.f32 %v1883, %v2015
      %v2018 = vmul.f32 %v1886, %v2015
      %v2019 = vmul.f32 %v1891, %v2015
      %v2020 = vmul.f32 %v1894, %v2015
      %v2021 = vmul.f32 %v1899, %v2015
      %v2022 = vmul.f32 %v1902, %v2015
      %v2023 = vmul.f32 %v1907, %v2015
      %v2024 = vmul.f32 %v1910, %v2015
      %v2025 = vmul.f32 %v1915, %v2015
      %v2026 = vmul.f32 %v1918, %v2015
      %v2027 = vmul.f32 %v1923, %v2015
      %v2028 = vmul.f32 %v1926, %v2015
      %v2029 = vmul.f32 %v1931, %v2015
      %v2030 = vmul.f32 %v1934, %v2015
      %v2031 = vmul.f32 %v1939, %v2015
      %v2032 = vmul.f32 %v1942, %v2015
      %v2033 = vmul.f32 %v1947, %v2015
      %v2034 = vmul.f32 %v1950, %v2015
      %v2035 = vmul.f32 %v1955, %v2015
      %v2036 = vmul.f32 %v1958, %v2015
      %v2037 = vmul.f32 %v1963, %v2015
      %v2038 = vmul.f32 %v1966, %v2015
      %v2039 = vmul.f32 %v1971, %v2015
      %v2040 = vmul.f32 %v1974, %v2015
      %v2041 = vmul.f32 %v1979, %v2015
      %v2042 = vmul.f32 %v1982, %v2015
      %v2043 = vmul.f32 %v1987, %v2015
      %v2044 = vmul.f32 %v1990, %v2015
      %v2045 = vmul.f32 %v1995, %v2015
      %v2046 = vmul.f32 %v1998, %v2015
      %v2047 = vmul.f32 %v2003, %v2015
      %v2048 = vmul.f32 %v2006, %v2015
      %v2050 = vlaneseq
      %v2051 = vshrl.u32 %v2050, 7
      %v2052 = vsub.s32 0, %v2051
      %v2053 = vrot.slane %v2010, %v2052
      %v2055 = vadd.f32 %v2017, %v2053
      %v2056 = vadd.f32 %v2018, %v2053
      %v2057 = vadd.f32 %v2019, %v2053
      %v2058 = vadd.f32 %v2020, %v2053
      %v2059 = vadd.f32 %v2021, %v2053
      %v2060 = vadd.f32 %v2022, %v2053
      %v2061 = vadd.f32 %v2023, %v2053
      %v2062 = vadd.f32 %v2024, %v2053
      %v2063 = vadd.f32 %v2025, %v2053
      %v2064 = vadd.f32 %v2026, %v2053
      %v2065 = vadd.f32 %v2027, %v2053
      %v2066 = vadd.f32 %v2028, %v2053
      %v2067 = vadd.f32 %v2029, %v2053
      %v2068 = vadd.f32 %v2030, %v2053
      %v2069 = vadd.f32 %v2031, %v2053
      %v2070 = vadd.f32 %v2032, %v2053
      %v2071 = vadd.f32 %v2033, %v2053
      %v2072 = vadd.f32 %v2034, %v2053
      %v2073 = vadd.f32 %v2035, %v2053
      %v2074 = vadd.f32 %v2036, %v2053
      %v2075 = vadd.f32 %v2037, %v2053
      %v2076 = vadd.f32 %v2038, %v2053
      %v2077 = vadd.f32 %v2039, %v2053
      %v2078 = vadd.f32 %v2040, %v2053
      %v2079 = vadd.f32 %v2041, %v2053
      %v2080 = vadd.f32 %v2042, %v2053
      %v2081 = vadd.f32 %v2043, %v2053
      %v2082 = vadd.f32 %v2044, %v2053
      %v2083 = vadd.f32 %v2045, %v2053
      %v2084 = vadd.f32 %v2046, %v2053
      %v2085 = vadd.f32 %v2047, %v2053
      %v2086 = vadd.f32 %v2048, %v2053
      %v2087 = vmax.f32 %v2055, 0.0
      %v2088 = vmax.f32 %v2056, 0.0
      %v2089 = vmax.f32 %v2057, 0.0
      %v2090 = vmax.f32 %v2058, 0.0
      %v2091 = vmax.f32 %v2059, 0.0
      %v2092 = vmax.f32 %v2060, 0.0
      %v2093 = vmax.f32 %v2061, 0.0
      %v2094 = vmax.f32 %v2062, 0.0
      %v2095 = vmax.f32 %v2063, 0.0
      %v2096 = vmax.f32 %v2064, 0.0
      %v2097 = vmax.f32 %v2065, 0.0
      %v2098 = vmax.f32 %v2066, 0.0
      %v2099 = vmax.f32 %v2067, 0.0
      %v2100 = vmax.f32 %v2068, 0.0
      %v2101 = vmax.f32 %v2069, 0.0
      %v2102 = vmax.f32 %v2070, 0.0
      %v2103 = vmax.f32 %v2071, 0.0
      %v2104 = vmax.f32 %v2072, 0.0
      %v2105 = vmax.f32 %v2073, 0.0
      %v2106 = vmax.f32 %v2074, 0.0
      %v2107 = vmax.f32 %v2075, 0.0
      %v2108 = vmax.f32 %v2076, 0.0
      %v2109 = vmax.f32 %v2077, 0.0
      %v2110 = vmax.f32 %v2078, 0.0
      %v2111 = vmax.f32 %v2079, 0.0
      %v2112 = vmax.f32 %v2080, 0.0
      %v2113 = vmax.f32 %v2081, 0.0
      %v2114 = vmax.f32 %v2082, 0.0
      %v2115 = vmax.f32 %v2083, 0.0
      %v2116 = vmax.f32 %v2084, 0.0
      %v2117 = vmax.f32 %v2085, 0.0
      %v2118 = vmax.f32 %v2086, 0.0
      %2119 = vst.msk [vmem:[%s244] sm:$0xff] %vm310, %v2087
      %2120 = vst.msk [vmem:[%s244 + $0x8] sm:$0xff] %vm310, %v2088
      %2121 = vst.msk [vmem:[%s244 + $0x10] sm:$0xff] %vm310, %v2089
      %2122 = vst.msk [vmem:[%s244 + $0x18] sm:$0xff] %vm310, %v2090
      %2123 = vst.msk [vmem:[%s244 + $0x20] sm:$0xff] %vm310, %v2091
      %2124 = vst.msk [vmem:[%s244 + $0x28] sm:$0xff] %vm310, %v2092
      %2125 = vst.msk [vmem:[%s244 + $0x30] sm:$0xff] %vm310, %v2093
      %2126 = vst.msk [vmem:[%s244 + $0x38] sm:$0xff] %vm310, %v2094
      %2127 = vst.msk [vmem:[%s244 + $0x40] sm:$0xff] %vm310, %v2095
      %2128 = vst.msk [vmem:[%s244 + $0x48] sm:$0xff] %vm310, %v2096
      %2129 = vst.msk [vmem:[%s244 + $0x50] sm:$0xff] %vm310, %v2097
      %2130 = vst.msk [vmem:[%s244 + $0x58] sm:$0xff] %vm310, %v2098
      %2131 = vst.msk [vmem:[%s244 + $0x60] sm:$0xff] %vm310, %v2099
      %2132 = vst.msk [vmem:[%s244 + $0x68] sm:$0xff] %vm310, %v2100
      %2133 = vst.msk [vmem:[%s244 + $0x70] sm:$0xff] %vm310, %v2101
      %2134 = vst.msk [vmem:[%s244 + $0x78] sm:$0xff] %vm310, %v2102
      %2135 = vst.msk [vmem:[%s244 + $0x80] sm:$0xff] %vm310, %v2103
      %2136 = vst.msk [vmem:[%s244 + $0x88] sm:$0xff] %vm310, %v2104
      %2137 = vst.msk [vmem:[%s244 + $0x90] sm:$0xff] %vm310, %v2105
      %2138 = vst.msk [vmem:[%s244 + $0x98] sm:$0xff] %vm310, %v2106
      %2139 = vst.msk [vmem:[%s244 + $0xa0] sm:$0xff] %vm310, %v2107
      %2140 = vst.msk [vmem:[%s244 + $0xa8] sm:$0xff] %vm310, %v2108
      %2141 = vst.msk [vmem:[%s244 + $0xb0] sm:$0xff] %vm310, %v2109
      %2142 = vst.msk [vmem:[%s244 + $0xb8] sm:$0xff] %vm310, %v2110
      %2143 = vst.msk [vmem:[%s244 + $0xc0] sm:$0xff] %vm310, %v2111
      %2144 = vst.msk [vmem:[%s244 + $0xc8] sm:$0xff] %vm310, %v2112
      %2145 = vst.msk [vmem:[%s244 + $0xd0] sm:$0xff] %vm310, %v2113
      %2146 = vst.msk [vmem:[%s244 + $0xd8] sm:$0xff] %vm310, %v2114
      %2147 = vst.msk [vmem:[%s244 + $0xe0] sm:$0xff] %vm310, %v2115
      %2148 = vst.msk [vmem:[%s244 + $0xe8] sm:$0xff] %vm310, %v2116
      %2149 = vst.msk [vmem:[%s244 + $0xf0] sm:$0xff] %vm310, %v2117
      %2150 = vst.msk [vmem:[%s244 + $0xf8] sm:$0xff] %vm310, %v2118
      %p2151 = scmp.lt.s32.totalorder %s16, 1
      %s2152 = scalar_select %p2151, %s16, 1
      %s2153 = smul.addr %s2152, 32
      %s2154 = smul.addr %s2153, 8
      %s2155 = scalar_lea.vmem %s5, %s2154
      // Predicated region
      $region41: #{cf_module_forward.1} parent=39 // pred_check
        %p2156 = pneg %p149
      $region42: #{cf_module_forward.1} parent=39 // pred_check_branch
        %2158 = sbr.rel (%p2156) target = $region44
      $region43: #{cf_module_forward.1} parent=39 // pred_region
        _
      $region44: #{cf_module_forward.1} parent=39 // pred_fallthru
        _
    $region40: #{cf_module_forward.1} parent=5 // pred_fallthru
      _
    %p2159 = scmp.le.s32.totalorder 2, %s11
    // Predicated region
    $region45: #{cf_module_forward.1} parent=5 // pred_check
      %p2160 = pneg %p2159
    $region46: #{cf_module_forward.1} parent=5 // pred_check_branch
      %2162 = sbr.rel (%p2160) target = $region48
    $region47: #{cf_module_forward.1} parent=5 // pred_region
      %s2163 = ssub.s32 %s11, 2
      // Predicated region
      $region49: #{cf_module_forward.1} parent=47 // pred_check
        %p2164 = pneg %p155
      $region50: #{cf_module_forward.1} parent=47 // pred_check_branch
        %2166 = sbr.rel (%p2164) target = $region52
      $region51: #{cf_module_forward.1} parent=47 // pred_region
        %p2167 = scmp.lt.s32.totalorder %s17, 1
        %s2168 = scalar_select %p2167, %s17, 1
        %s2169 = smul.addr %s2168, 32
        %s2170 = smul.addr %s2169, 8
        %s2171 = scalar_lea.vmem %s5, %s2170
      $region52: #{cf_module_forward.1} parent=47 // pred_fallthru
        _
    $region48: #{cf_module_forward.1} parent=5 // pred_fallthru
      _
  $region6: #{cf_module_forward.1} parent=0 // loop_footer
    %s15 = sadd.s32 1, %s11
  $region7: #{cf_module_forward.1} parent=0 // loop_footer_branch
    %10 = sbr.rel target = $region3
  $region8: #{cf_module_forward.1} parent=0 // loop_exit
    _

</llo_original>
